<compile_context>
chip_gen: v6e
topology: v6e:2x2x1
jax: 0.10.0
libtpu: 0.0.40
codegen_flags: <defaults>
</compile_context>

<pallas_src>
import functools

import jax
import jax.numpy as jnp
import numpy as np
from jax import lax
from jax.experimental import pallas as pl
from jax.experimental.pallas import tpu as pltpu


# --------------------------- dense projection (no bias) ----------------------

def _dense_kernel(x_ref, w_ref, o_ref):
    o_ref[...] = jnp.dot(x_ref[...], w_ref[...],
                         preferred_element_type=jnp.float32).astype(o_ref.dtype)


def dense(x, w, *, out_dtype=jnp.bfloat16, tile_m=256):
    """(M,K) @ (K,N) -> (M,N). Row-tiled grid; weight VMEM-resident (constant map)."""
    M, K = x.shape
    K2, N = w.shape
    assert K == K2
    tm = min(tile_m, M)
    return pl.pallas_call(
        _dense_kernel,
        grid=(pl.cdiv(M, tm),),
        in_specs=[pl.BlockSpec((tm, K), lambda i: (i, 0)),
                  pl.BlockSpec((K, N), lambda i: (0, 0))],
        out_specs=pl.BlockSpec((tm, N), lambda i: (i, 0)),
        out_shape=jax.ShapeDtypeStruct((M, N), out_dtype),
        compiler_params=pltpu.CompilerParams(
            dimension_semantics=("parallel",)),
    )(x, w)


# ------------------------------ BD score kernel -------------------------------

def _bd_kernel(wh_ref, rk_ref, rrb_ref, bd_ref, *, num_heads, head_dim):
    # per batch: BD[h] = (q_h + r_r_bias_h) @ r_head_k_h^T   -> (T, R)
    dn = (((1,), (1,)), ((), ()))
    for h in range(num_heads):
        lo, hi = h * head_dim, (h + 1) * head_dim
        qh = (wh_ref[0, :, lo:hi].astype(jnp.float32)
              + rrb_ref[:, lo:hi]).astype(jnp.bfloat16)          # (T, d)
        rkh = rk_ref[:, lo:hi]                                    # (R, d) bf16
        bd_ref[0, h] = lax.dot_general(qh, rkh, dn,
                                       preferred_element_type=jnp.float32)


def bd_scores(w_heads, r_head_k, rr_bias, *, num_heads, head_dim):
    """w_heads (B,T,3nd) bf16, r_head_k (R,nd) bf16, rr_bias (1,nd) f32 -> (B,n,T,R) f32."""
    B, T, three_nd = w_heads.shape
    R, nd = r_head_k.shape
    kern = functools.partial(_bd_kernel, num_heads=num_heads, head_dim=head_dim)
    return pl.pallas_call(
        kern,
        grid=(B,),
        in_specs=[pl.BlockSpec((1, T, three_nd), lambda b: (b, 0, 0)),
                  pl.BlockSpec((R, nd), lambda b: (0, 0)),
                  pl.BlockSpec((1, nd), lambda b: (0, 0))],
        out_specs=pl.BlockSpec((1, num_heads, T, R), lambda b: (b, 0, 0, 0)),
        out_shape=jax.ShapeDtypeStruct((B, num_heads, T, R), jnp.float32),
        compiler_params=pltpu.CompilerParams(
            dimension_semantics=("parallel",)),
    )(w_heads, r_head_k, rr_bias)


# ------------------- fused attention core (AC + softmax + PV) -----------------

def _attn_core_kernel(wh_ref, bd_ref, rwb_ref, o_ref, *,
                      num_heads, head_dim, scale):
    nd = num_heads * head_dim
    dn = (((1,), (1,)), ((), ()))
    outs = []
    for h in range(num_heads):
        lo, hi = h * head_dim, (h + 1) * head_dim
        qh = (wh_ref[0, :, lo:hi].astype(jnp.float32)
              + rwb_ref[:, lo:hi]).astype(jnp.bfloat16)           # (T, d)
        kh = wh_ref[0, :, nd + lo:nd + hi]                         # (T, d) bf16
        vh = wh_ref[0, :, 2 * nd + lo:2 * nd + hi]                 # (T, d) bf16
        ac = lax.dot_general(qh, kh, dn,
                             preferred_element_type=jnp.float32)   # (T, T)
        s = (ac + bd_ref[0, h]) * scale                            # fused scale
        m = jnp.max(s, axis=-1, keepdims=True)
        e = jnp.exp(s - m)
        denom = jnp.sum(e, axis=-1, keepdims=True)
        p = e * pl.reciprocal(denom, approx=True)                  # EUP divide
        pv = jnp.dot(p.astype(jnp.bfloat16), vh,
                     preferred_element_type=jnp.float32)           # (T, d)
        outs.append(pv)
    # single lane-dense store of all heads
    o_ref[0] = jnp.concatenate(outs, axis=-1).astype(o_ref.dtype)


def attn_core(w_heads, bd_shift, rw_bias, *, num_heads, head_dim, scale):
    """-> attn_vec (B, T, n*d) bf16; scores/probs never leave VMEM."""
    B, T, three_nd = w_heads.shape
    nd = num_heads * head_dim
    kern = functools.partial(_attn_core_kernel, num_heads=num_heads,
                             head_dim=head_dim, scale=scale)
    return pl.pallas_call(
        kern,
        grid=(B,),
        in_specs=[pl.BlockSpec((1, T, three_nd), lambda b: (b, 0, 0)),
                  pl.BlockSpec((1, num_heads, T, T), lambda b: (b, 0, 0, 0)),
                  pl.BlockSpec((1, nd), lambda b: (0, 0))],
        out_specs=pl.BlockSpec((1, T, nd), lambda b: (b, 0, 0)),
        out_shape=jax.ShapeDtypeStruct((B, T, nd), jnp.bfloat16),
        compiler_params=pltpu.CompilerParams(
            dimension_semantics=("parallel",)),
    )(w_heads, bd_shift, rw_bias)


# ------------------- o_net + residual + LayerNorm (fused, tiled) --------------

def _out_ln_kernel(a_ref, w_ref, r_ref, g_ref, b_ref, o_ref):
    y = jnp.dot(a_ref[...], w_ref[...],
                preferred_element_type=jnp.float32) + r_ref[...]
    mu = jnp.mean(y, axis=-1, keepdims=True)
    var = jnp.mean((y - mu) ** 2, axis=-1, keepdims=True)
    o_ref[...] = (y - mu) * lax.rsqrt(var + 1e-5) * g_ref[...] + b_ref[...]


def out_proj_residual_layernorm(attn_vec, w_o_t, resid, ln_g, ln_b, *, tile_m=256):
    M, D = attn_vec.shape
    _, H = w_o_t.shape
    tm = min(tile_m, M)
    return pl.pallas_call(
        _out_ln_kernel,
        grid=(pl.cdiv(M, tm),),
        in_specs=[pl.BlockSpec((tm, D), lambda i: (i, 0)),
                  pl.BlockSpec((D, H), lambda i: (0, 0)),
                  pl.BlockSpec((tm, H), lambda i: (i, 0)),
                  pl.BlockSpec((1, H), lambda i: (0, 0)),
                  pl.BlockSpec((1, H), lambda i: (0, 0))],
        out_specs=pl.BlockSpec((tm, H), lambda i: (i, 0)),
        out_shape=jax.ShapeDtypeStruct((M, H), jnp.float32),
        compiler_params=pltpu.CompilerParams(
            dimension_semantics=("parallel",)),
    )(attn_vec, w_o_t, resid, ln_g, ln_b)


# ------------------ position-wise FFN + residual + LayerNorm ------------------

def _ffn_kernel(x_ref, w1_ref, b1_ref, w2_ref, b2_ref, g_ref, b_ref, o_ref):
    x = x_ref[...]
    h = jnp.dot(x.astype(jnp.bfloat16), w1_ref[...],
                preferred_element_type=jnp.float32) + b1_ref[...]
    h = jnp.maximum(h, 0.0)
    y = jnp.dot(h.astype(jnp.bfloat16), w2_ref[...],
                preferred_element_type=jnp.float32) + b2_ref[...]
    y = y + x
    mu = jnp.mean(y, axis=-1, keepdims=True)
    var = jnp.mean((y - mu) ** 2, axis=-1, keepdims=True)
    o_ref[...] = (y - mu) * lax.rsqrt(var + 1e-5) * g_ref[...] + b_ref[...]


def position_wise_ff(x2d, w1_t, b1, w2_t, b2, ln_g, ln_b, *, tile_m=256):
    M, H = x2d.shape
    F = w1_t.shape[1]
    tm = min(tile_m, M)          # NOTE: halve tile_m for v7x (64 MiB VMEM) at prod sizes
    return pl.pallas_call(
        _ffn_kernel,
        grid=(pl.cdiv(M, tm),),
        in_specs=[pl.BlockSpec((tm, H), lambda i: (i, 0)),
                  pl.BlockSpec((H, F), lambda i: (0, 0)),
                  pl.BlockSpec((1, F), lambda i: (0, 0)),
                  pl.BlockSpec((F, H), lambda i: (0, 0)),
                  pl.BlockSpec((1, H), lambda i: (0, 0)),
                  pl.BlockSpec((1, H), lambda i: (0, 0)),
                  pl.BlockSpec((1, H), lambda i: (0, 0))],
        out_specs=pl.BlockSpec((tm, H), lambda i: (i, 0)),
        out_shape=jax.ShapeDtypeStruct((M, H), jnp.float32),
        compiler_params=pltpu.CompilerParams(
            dimension_semantics=("parallel",)),
    )(x2d, w1_t, b1, w2_t, b2, ln_g, ln_b)


# ---------------------------------- forward ------------------------------------

def rel_partial_decoder_layer(params, x, pos_embed):
    """Forward pass of RelPartialLearnableDecoderLayer (post-LN, eval, no memory)."""
    T, B, H = x.shape
    R = pos_embed.shape[0]
    n, d = params["r_w_bias"].shape
    nd = n * d
    scale = 1.0 / (d ** 0.5)
    assert R == T, "fused attention assumes rlen == qlen (memory=None, no mask)"

    # batch-major working layout (small O(T*B*H) transpose; avoids the O(B*n*T^2)
    # transposes the old version did around the score tensors)
    xb = jnp.transpose(x, (1, 0, 2))                     # (B, T, H)
    xb2d = xb.reshape(B * T, H)

    w_qkv_t = params["w_qkv"].T.astype(jnp.bfloat16)     # (H, 3nd)
    w_r_t = params["w_r"].T.astype(jnp.bfloat16)         # (H, nd)
    w_o_t = params["w_o"].T.astype(jnp.bfloat16)         # (nd, H)
    w1_t = params["w1"].T.astype(jnp.bfloat16)           # (H, F)
    w2_t = params["w2"].T.astype(jnp.bfloat16)           # (F, H)

    # ---- projections (Pallas, bf16 MXU / f32 accumulate) ----
    w_heads = dense(xb2d.astype(jnp.bfloat16), w_qkv_t,
                    out_dtype=jnp.bfloat16).reshape(B, T, 3 * nd)
    r_head_k = dense(pos_embed.astype(jnp.bfloat16), w_r_t,
                     out_dtype=jnp.bfloat16)             # (R, nd)

    rwb = params["r_w_bias"].reshape(1, nd)
    rrb = params["r_r_bias"].reshape(1, nd)

    # ---- BD scores (Pallas) + exact torch _rel_shift as one JAX layout pass ----
    bd = bd_scores(w_heads, r_head_k, rrb, num_heads=n, head_dim=d)  # (B,n,T,R)
    pad = jnp.concatenate([jnp.zeros((B, n, T, 1), bd.dtype), bd], axis=-1)
    bd_shift = pad.reshape(B, n, T + 1, T)[:, :, 1:, :]              # (B,n,T,T)

    # ---- fused AC + (AC+BD)*scale + softmax + P@V (Pallas) ----
    attn_vec = attn_core(w_heads, bd_shift, rwb,
                         num_heads=n, head_dim=d, scale=scale)       # (B,T,nd) bf16
    attn_vec2d = attn_vec.reshape(B * T, nd)

    # ---- o_net + residual + LayerNorm (Pallas, fused, row-tiled) ----
    out1 = out_proj_residual_layernorm(
        attn_vec2d, w_o_t, xb2d,
        params["ln1_g"].reshape(1, H), params["ln1_b"].reshape(1, H))

    # ---- PositionWiseFF + residual + LayerNorm (Pallas, fused, row-tiled) ----
    out2 = position_wise_ff(
        out1, w1_t, params["b1"].reshape(1, -1),
        w2_t, params["b2"].reshape(1, H),
        params["ln2_g"].reshape(1, H), params["ln2_b"].reshape(1, H))

    return jnp.transpose(out2.reshape(B, T, H), (1, 0, 2))           # (T, B, H)


# ------------------------- pure-JAX f32 reference ------------------------------

def _rel_shift(x):
    """Exact reproduction of RelPartialLearnableMultiHeadAttn._rel_shift on (I,J,B,N)."""
    I, J, B, N = x.shape
    zero_pad = jnp.zeros((I, 1, B, N), x.dtype)
    x_padded = jnp.concatenate([zero_pad, x], axis=1)
    x_padded = x_padded.reshape(J + 1, I, B, N)
    return x_padded[1:].reshape(I, J, B, N)


def _layer_norm_ref(x, g, b, eps=1e-5):
    mu = jnp.mean(x, axis=-1, keepdims=True)
    var = jnp.mean((x - mu) ** 2, axis=-1, keepdims=True)
    return (x - mu) * lax.rsqrt(var + eps) * g + b


def reference(params, x, pos_embed):
    T, B, H = x.shape
    R = pos_embed.shape[0]
    n, d = params["r_w_bias"].shape
    scale = 1.0 / (d ** 0.5)

    w_heads = x @ params["w_qkv"].T
    r_head_k = (pos_embed @ params["w_r"].T).reshape(R, n, d)
    q, k, v = jnp.split(w_heads, 3, axis=-1)
    q = q.reshape(T, B, n, d)
    k = k.reshape(T, B, n, d)
    v = v.reshape(T, B, n, d)

    ac = jnp.einsum("ibnd,jbnd->ijbn", q + params["r_w_bias"], k)
    bd = jnp.einsum("ibnd,jnd->ijbn", q + params["r_r_bias"], r_head_k)
    bd = _rel_shift(bd)
    score = (ac + bd) * scale
    prob = jax.nn.softmax(score, axis=1)
    vec = jnp.einsum("ijbn,jbnd->ibnd", prob, v).reshape(T, B, n * d)
    y = _layer_norm_ref(x + vec @ params["w_o"].T,
                        params["ln1_g"], params["ln1_b"])
    h = jax.nn.relu(y @ params["w1"].T + params["b1"])
    z = h @ params["w2"].T + params["b2"]
    return _layer_norm_ref(y + z, params["ln2_g"], params["ln2_b"])


# ------------------------------------ main --------------------------------------

if __name__ == "__main__":
    T, B, H = 8, 2, 32          # seq_len, batch, hidden_dim
    n, d = 2, 8                 # num_heads, head_dim
    F = 64                      # ffn_inner_dim
    R = T                       # rlen == key length (no memory)

    key = jax.random.PRNGKey(0)
    ks = jax.random.split(key, 16)

    def init(k, shape, s=0.05):
        return (s * jax.random.normal(k, shape)).astype(jnp.float32)

    params = dict(
        w_qkv=init(ks[0], (3 * n * d, H)),          # qkv_net.weight
        w_r=init(ks[1], (n * d, H)),                # r_net.weight
        w_o=init(ks[2], (H, n * d)),                # o_net.weight
        r_w_bias=init(ks[3], (n, d)),
        r_r_bias=init(ks[4], (n, d)),
        ln1_g=(1.0 + 0.02 * jax.random.normal(ks[5], (H,))).astype(jnp.float32),
        ln1_b=jnp.zeros((H,), jnp.float32),
        w1=init(ks[6], (F, H)),                     # core_net[0].weight
        b1=init(ks[7], (F,)),
        w2=init(ks[8], (H, F)),                     # core_net[3].weight
        b2=init(ks[9], (H,)),
        ln2_g=(1.0 + 0.02 * jax.random.normal(ks[10], (H,))).astype(jnp.float32),
        ln2_b=jnp.zeros((H,), jnp.float32),
    )

    x = jax.random.normal(ks[11], (T, B, H), jnp.float32)
    pos = jax.random.normal(ks[12], (R, H), jnp.float32)

    fwd = jax.jit(functools.partial(rel_partial_decoder_layer, params))
    out = jax.block_until_ready(fwd(x, pos))

    assert out.shape == (T, B, H)
    assert bool(jnp.all(jnp.isfinite(out)))

    ref = reference(params, x, pos)
    np.testing.assert_allclose(np.asarray(out), np.asarray(ref),
                               rtol=5e-2, atol=5e-2)
    print("KERNEL_OK")
</pallas_src>

<mosaic_0001>
module attributes {stable_mosaic.version = 11 : i64} {
  func.func @_dense_kernel(%arg0: i32, %arg1: memref<16x32xbf16, #tpu.memory_space<vmem>>, %arg2: memref<32x48xbf16, #tpu.memory_space<vmem>>, %arg3: memref<16x48xbf16, #tpu.memory_space<vmem>>) attributes {dimension_semantics = [#tpu.dimension_semantics<parallel>], iteration_bounds = array<i64: 1>, scalar_prefetch = 0 : i64, scratch_operands = 0 : i64, tpu.core_type = #tpu.core_type<tc>, window_params = [{transform_indices = @transform_0, window_bounds = array<i64: 16, 32>}, {pipeline_mode = #tpu.pipeline_mode<synchronous>, transform_indices = @transform_1, window_bounds = array<i64: 32, 48>}, {transform_indices = @transform_2, window_bounds = array<i64: 16, 48>}]} {
    %c0 = arith.constant 0 : index
    %c0_0 = arith.constant 0 : index
    %0 = vector.load %arg1[%c0, %c0_0] : memref<16x32xbf16, #tpu.memory_space<vmem>>, vector<16x32xbf16>
    %c0_1 = arith.constant 0 : index
    %c0_2 = arith.constant 0 : index
    %1 = vector.load %arg2[%c0_1, %c0_2] : memref<32x48xbf16, #tpu.memory_space<vmem>>, vector<32x48xbf16>
    %cst = arith.constant dense<0.000000e+00> : vector<16x48xf32>
    %2 = tpu.matmul %0, %1, %cst {dimension_numbers = #tpu.dot_dimension_numbers<[1], [0], [0], [1], [0, 0, 1, 1], [], []>} : vector<16x32xbf16>, vector<32x48xbf16>, vector<16x48xf32> -> vector<16x48xf32>
    %3 = arith.truncf %2 : vector<16x48xf32> to vector<16x48xbf16>
    %c0_3 = arith.constant 0 : index
    %c0_4 = arith.constant 0 : index
    %4 = vector.load %arg3[%c0_3, %c0_4] : memref<16x48xbf16, #tpu.memory_space<vmem>>, vector<16x48xbf16>
    tpu.vector_store %arg3[%c0_3, %c0_4], %3 {strides = array<i32>} : memref<16x48xbf16, #tpu.memory_space<vmem>>, vector<16x48xbf16>,
    return
  }
  func.func @transform_0(%arg0: i32) -> (i32, i32) {
    %c0_i32 = arith.constant 0 : i32
    %c0_i32_0 = arith.constant 0 : i32
    return %arg0, %c0_i32 : i32, i32
  }
  func.func @transform_1(%arg0: i32) -> (i32, i32) {
    %c0_i32 = arith.constant 0 : i32
    %c0_i32_0 = arith.constant 0 : i32
    %c0_i32_1 = arith.constant 0 : i32
    return %c0_i32, %c0_i32_0 : i32, i32
  }
  func.func @transform_2(%arg0: i32) -> (i32, i32) {
    %c0_i32 = arith.constant 0 : i32
    %c0_i32_0 = arith.constant 0 : i32
    return %arg0, %c0_i32 : i32, i32
  }
}

module attributes {stable_mosaic.version = 11 : i64} {
  func.func @_dense_kernel(%arg0: i32, %arg1: memref<8x32xbf16, #tpu.memory_space<vmem>>, %arg2: memref<32x16xbf16, #tpu.memory_space<vmem>>, %arg3: memref<8x16xbf16, #tpu.memory_space<vmem>>) attributes {dimension_semantics = [#tpu.dimension_semantics<parallel>], iteration_bounds = array<i64: 1>, scalar_prefetch = 0 : i64, scratch_operands = 0 : i64, tpu.core_type = #tpu.core_type<tc>, window_params = [{transform_indices = @transform_0, window_bounds = array<i64: 8, 32>}, {pipeline_mode = #tpu.pipeline_mode<synchronous>, transform_indices = @transform_1, window_bounds = array<i64: 32, 16>}, {transform_indices = @transform_2, window_bounds = array<i64: 8, 16>}]} {
    %c0 = arith.constant 0 : index
    %c0_0 = arith.constant 0 : index
    %0 = vector.load %arg1[%c0, %c0_0] : memref<8x32xbf16, #tpu.memory_space<vmem>>, vector<8x32xbf16>
    %c0_1 = arith.constant 0 : index
    %c0_2 = arith.constant 0 : index
    %1 = vector.load %arg2[%c0_1, %c0_2] : memref<32x16xbf16, #tpu.memory_space<vmem>>, vector<32x16xbf16>
    %cst = arith.constant dense<0.000000e+00> : vector<8x16xf32>
    %2 = tpu.matmul %0, %1, %cst {dimension_numbers = #tpu.dot_dimension_numbers<[1], [0], [0], [1], [0, 0, 1, 1], [], []>} : vector<8x32xbf16>, vector<32x16xbf16>, vector<8x16xf32> -> vector<8x16xf32>
    %3 = arith.truncf %2 : vector<8x16xf32> to vector<8x16xbf16>
    %c0_3 = arith.constant 0 : index
    %c0_4 = arith.constant 0 : index
    %4 = vector.load %arg3[%c0_3, %c0_4] : memref<8x16xbf16, #tpu.memory_space<vmem>>, vector<8x16xbf16>
    tpu.vector_store %arg3[%c0_3, %c0_4], %3 {strides = array<i32>} : memref<8x16xbf16, #tpu.memory_space<vmem>>, vector<8x16xbf16>,
    return
  }
  func.func @transform_0(%arg0: i32) -> (i32, i32) {
    %c0_i32 = arith.constant 0 : i32
    %c0_i32_0 = arith.constant 0 : i32
    return %arg0, %c0_i32 : i32, i32
  }
  func.func @transform_1(%arg0: i32) -> (i32, i32) {
    %c0_i32 = arith.constant 0 : i32
    %c0_i32_0 = arith.constant 0 : i32
    %c0_i32_1 = arith.constant 0 : i32
    return %c0_i32, %c0_i32_0 : i32, i32
  }
  func.func @transform_2(%arg0: i32) -> (i32, i32) {
    %c0_i32 = arith.constant 0 : i32
    %c0_i32_0 = arith.constant 0 : i32
    return %arg0, %c0_i32 : i32, i32
  }
}

module attributes {stable_mosaic.version = 11 : i64} {
  func.func @_bd_kernel(%arg0: i32, %arg1: memref<1x8x48xbf16, #tpu.memory_space<vmem>>, %arg2: memref<8x16xbf16, #tpu.memory_space<vmem>>, %arg3: memref<1x16xf32, #tpu.memory_space<vmem>>, %arg4: memref<1x2x8x8xf32, #tpu.memory_space<vmem>>) attributes {dimension_semantics = [#tpu.dimension_semantics<parallel>], iteration_bounds = array<i64: 2>, scalar_prefetch = 0 : i64, scratch_operands = 0 : i64, tpu.core_type = #tpu.core_type<tc>, window_params = [{transform_indices = @transform_0, window_bounds = array<i64: 1, 8, 48>}, {pipeline_mode = #tpu.pipeline_mode<synchronous>, transform_indices = @transform_1, window_bounds = array<i64: 8, 16>}, {pipeline_mode = #tpu.pipeline_mode<synchronous>, transform_indices = @transform_2, window_bounds = array<i64: 1, 16>}, {transform_indices = @transform_3, window_bounds = array<i64: 1, 2, 8, 8>}]} {
    %c0 = arith.constant 0 : index
    %c0_0 = arith.constant 0 : index
    %c0_1 = arith.constant 0 : index
    %0 = vector.load %arg1[%c0, %c0_0, %c0_1] : memref<1x8x48xbf16, #tpu.memory_space<vmem>>, vector<1x8x8xbf16>
    %1 = vector.shape_cast %0 : vector<1x8x8xbf16> to vector<8x8xbf16>
    %2 = arith.extf %1 : vector<8x8xbf16> to vector<8x8xf32>
    %c0_2 = arith.constant 0 : index
    %c0_3 = arith.constant 0 : index
    %3 = vector.load %arg3[%c0_2, %c0_3] : memref<1x16xf32, #tpu.memory_space<vmem>>, vector<1x8xf32>
    %4 = vector.broadcast %3 : vector<1x8xf32> to vector<8x8xf32>
    %5 = arith.addf %2, %4 : vector<8x8xf32>
    %6 = arith.truncf %5 : vector<8x8xf32> to vector<8x8xbf16>
    %c0_4 = arith.constant 0 : index
    %c0_5 = arith.constant 0 : index
    %7 = vector.load %arg2[%c0_4, %c0_5] : memref<8x16xbf16, #tpu.memory_space<vmem>>, vector<8x8xbf16>
    %cst = arith.constant dense<0.000000e+00> : vector<8x8xf32>
    %8 = tpu.matmul %6, %7, %cst {dimension_numbers = #tpu.dot_dimension_numbers<[1], [1], [0], [0], [0, 0, 1, 0], [], []>} : vector<8x8xbf16>, vector<8x8xbf16>, vector<8x8xf32> -> vector<8x8xf32>
    %c0_6 = arith.constant 0 : index
    %c0_7 = arith.constant 0 : index
    %c0_8 = arith.constant 0 : index
    %c0_9 = arith.constant 0 : index
    %9 = vector.load %arg4[%c0_6, %c0_7, %c0_8, %c0_9] : memref<1x2x8x8xf32, #tpu.memory_space<vmem>>, vector<1x1x8x8xf32>
    %10 = vector.shape_cast %9 : vector<1x1x8x8xf32> to vector<8x8xf32>
    %11 = vector.shape_cast %8 : vector<8x8xf32> to vector<1x1x8x8xf32>
    tpu.vector_store %arg4[%c0_6, %c0_7, %c0_8, %c0_9], %11 {strides = array<i32>} : memref<1x2x8x8xf32, #tpu.memory_space<vmem>>, vector<1x1x8x8xf32>,
    %c0_10 = arith.constant 0 : index
    %c0_11 = arith.constant 0 : index
    %c8 = arith.constant 8 : index
    %12 = vector.load %arg1[%c0_10, %c0_11, %c8] : memref<1x8x48xbf16, #tpu.memory_space<vmem>>, vector<1x8x8xbf16>
    %13 = vector.shape_cast %12 : vector<1x8x8xbf16> to vector<8x8xbf16>
    %14 = arith.extf %13 : vector<8x8xbf16> to vector<8x8xf32>
    %c0_12 = arith.constant 0 : index
    %c8_13 = arith.constant 8 : index
    %15 = vector.load %arg3[%c0_12, %c8_13] : memref<1x16xf32, #tpu.memory_space<vmem>>, vector<1x8xf32>
    %16 = vector.broadcast %15 : vector<1x8xf32> to vector<8x8xf32>
    %17 = arith.addf %14, %16 : vector<8x8xf32>
    %18 = arith.truncf %17 : vector<8x8xf32> to vector<8x8xbf16>
    %c0_14 = arith.constant 0 : index
    %c8_15 = arith.constant 8 : index
    %19 = vector.load %arg2[%c0_14, %c8_15] : memref<8x16xbf16, #tpu.memory_space<vmem>>, vector<8x8xbf16>
    %cst_16 = arith.constant dense<0.000000e+00> : vector<8x8xf32>
    %20 = tpu.matmul %18, %19, %cst_16 {dimension_numbers = #tpu.dot_dimension_numbers<[1], [1], [0], [0], [0, 0, 1, 0], [], []>} : vector<8x8xbf16>, vector<8x8xbf16>, vector<8x8xf32> -> vector<8x8xf32>
    %c0_17 = arith.constant 0 : index
    %c1 = arith.constant 1 : index
    %c0_18 = arith.constant 0 : index
    %c0_19 = arith.constant 0 : index
    %21 = vector.load %arg4[%c0_17, %c1, %c0_18, %c0_19] : memref<1x2x8x8xf32, #tpu.memory_space<vmem>>, vector<1x1x8x8xf32>
    %22 = vector.shape_cast %21 : vector<1x1x8x8xf32> to vector<8x8xf32>
    %23 = vector.shape_cast %20 : vector<8x8xf32> to vector<1x1x8x8xf32>
    tpu.vector_store %arg4[%c0_17, %c1, %c0_18, %c0_19], %23 {strides = array<i32>} : memref<1x2x8x8xf32, #tpu.memory_space<vmem>>, vector<1x1x8x8xf32>,
    return
  }
  func.func @transform_0(%arg0: i32) -> (i32, i32, i32) {
    %c0_i32 = arith.constant 0 : i32
    %c0_i32_0 = arith.constant 0 : i32
    %c0_i32_1 = arith.constant 0 : i32
    return %arg0, %c0_i32, %c0_i32_0 : i32, i32, i32
  }
  func.func @transform_1(%arg0: i32) -> (i32, i32) {
    %c0_i32 = arith.constant 0 : i32
    %c0_i32_0 = arith.constant 0 : i32
    %c0_i32_1 = arith.constant 0 : i32
    return %c0_i32, %c0_i32_0 : i32, i32
  }
  func.func @transform_2(%arg0: i32) -> (i32, i32) {
    %c0_i32 = arith.constant 0 : i32
    %c0_i32_0 = arith.constant 0 : i32
    %c0_i32_1 = arith.constant 0 : i32
    return %c0_i32, %c0_i32_0 : i32, i32
  }
  func.func @transform_3(%arg0: i32) -> (i32, i32, i32, i32) {
    %c0_i32 = arith.constant 0 : i32
    %c0_i32_0 = arith.constant 0 : i32
    %c0_i32_1 = arith.constant 0 : i32
    %c0_i32_2 = arith.constant 0 : i32
    return %arg0, %c0_i32, %c0_i32_0, %c0_i32_1 : i32, i32, i32, i32
  }
}

module attributes {stable_mosaic.version = 11 : i64} {
  func.func @_attn_core_kernel(%arg0: i32, %arg1: memref<1x8x48xbf16, #tpu.memory_space<vmem>>, %arg2: memref<1x2x8x8xf32, #tpu.memory_space<vmem>>, %arg3: memref<1x16xf32, #tpu.memory_space<vmem>>, %arg4: memref<1x8x16xbf16, #tpu.memory_space<vmem>>) attributes {dimension_semantics = [#tpu.dimension_semantics<parallel>], iteration_bounds = array<i64: 2>, scalar_prefetch = 0 : i64, scratch_operands = 0 : i64, tpu.core_type = #tpu.core_type<tc>, window_params = [{transform_indices = @transform_0, window_bounds = array<i64: 1, 8, 48>}, {transform_indices = @transform_1, window_bounds = array<i64: 1, 2, 8, 8>}, {pipeline_mode = #tpu.pipeline_mode<synchronous>, transform_indices = @transform_2, window_bounds = array<i64: 1, 16>}, {transform_indices = @transform_3, window_bounds = array<i64: 1, 8, 16>}]} {
    %c0 = arith.constant 0 : index
    %c0_0 = arith.constant 0 : index
    %c0_1 = arith.constant 0 : index
    %0 = vector.load %arg1[%c0, %c0_0, %c0_1] : memref<1x8x48xbf16, #tpu.memory_space<vmem>>, vector<1x8x8xbf16>
    %1 = vector.shape_cast %0 : vector<1x8x8xbf16> to vector<8x8xbf16>
    %2 = arith.extf %1 : vector<8x8xbf16> to vector<8x8xf32>
    %c0_2 = arith.constant 0 : index
    %c0_3 = arith.constant 0 : index
    %3 = vector.load %arg3[%c0_2, %c0_3] : memref<1x16xf32, #tpu.memory_space<vmem>>, vector<1x8xf32>
    %4 = vector.broadcast %3 : vector<1x8xf32> to vector<8x8xf32>
    %5 = arith.addf %2, %4 : vector<8x8xf32>
    %6 = arith.truncf %5 : vector<8x8xf32> to vector<8x8xbf16>
    %c0_4 = arith.constant 0 : index
    %c0_5 = arith.constant 0 : index
    %c16 = arith.constant 16 : index
    %7 = vector.load %arg1[%c0_4, %c0_5, %c16] : memref<1x8x48xbf16, #tpu.memory_space<vmem>>, vector<1x8x8xbf16>
    %8 = vector.shape_cast %7 : vector<1x8x8xbf16> to vector<8x8xbf16>
    %c0_6 = arith.constant 0 : index
    %c0_7 = arith.constant 0 : index
    %c32 = arith.constant 32 : index
    %9 = vector.load %arg1[%c0_6, %c0_7, %c32] : memref<1x8x48xbf16, #tpu.memory_space<vmem>>, vector<1x8x8xbf16>
    %10 = vector.shape_cast %9 : vector<1x8x8xbf16> to vector<8x8xbf16>
    %cst = arith.constant dense<0.000000e+00> : vector<8x8xf32>
    %11 = tpu.matmul %6, %8, %cst {dimension_numbers = #tpu.dot_dimension_numbers<[1], [1], [0], [0], [0, 0, 1, 0], [], []>} : vector<8x8xbf16>, vector<8x8xbf16>, vector<8x8xf32> -> vector<8x8xf32>
    %c0_8 = arith.constant 0 : index
    %c0_9 = arith.constant 0 : index
    %c0_10 = arith.constant 0 : index
    %c0_11 = arith.constant 0 : index
    %12 = vector.load %arg2[%c0_8, %c0_9, %c0_10, %c0_11] : memref<1x2x8x8xf32, #tpu.memory_space<vmem>>, vector<1x1x8x8xf32>
    %13 = vector.shape_cast %12 : vector<1x1x8x8xf32> to vector<8x8xf32>
    %14 = arith.addf %11, %13 : vector<8x8xf32>
    %cst_12 = arith.constant 0.353553385 : f32
    %15 = vector.broadcast %cst_12 : f32 to vector<8x8xf32>
    %16 = arith.mulf %14, %15 : vector<8x8xf32>
    %cst_13 = arith.constant dense<0xFF800000> : vector<8xf32>
    %17 = vector.multi_reduction <maximumf>, %16, %cst_13 [1] : vector<8x8xf32> to vector<8xf32>
    %18 = vector.shape_cast %17 : vector<8xf32> to vector<8x1xf32>
    %19 = vector.broadcast %18 : vector<8x1xf32> to vector<8x8xf32>
    %20 = arith.subf %16, %19 : vector<8x8xf32>
    %21 = math.exp %20 : vector<8x8xf32>
    %cst_14 = arith.constant dense<0.000000e+00> : vector<8xf32>
    %22 = vector.multi_reduction <add>, %21, %cst_14 [1] : vector<8x8xf32> to vector<8xf32>
    %23 = vector.shape_cast %22 : vector<8xf32> to vector<8x1xf32>
    %24 = tpu.reciprocal %23 {approx = true} : vector<8x1xf32> -> vector<8x1xf32>
    %25 = vector.broadcast %24 : vector<8x1xf32> to vector<8x8xf32>
    %26 = arith.mulf %21, %25 : vector<8x8xf32>
    %27 = arith.truncf %26 : vector<8x8xf32> to vector<8x8xbf16>
    %cst_15 = arith.constant dense<0.000000e+00> : vector<8x8xf32>
    %28 = tpu.matmul %27, %10, %cst_15 {dimension_numbers = #tpu.dot_dimension_numbers<[1], [0], [0], [1], [0, 0, 1, 1], [], []>} : vector<8x8xbf16>, vector<8x8xbf16>, vector<8x8xf32> -> vector<8x8xf32>
    %c0_16 = arith.constant 0 : index
    %c0_17 = arith.constant 0 : index
    %c8 = arith.constant 8 : index
    %29 = vector.load %arg1[%c0_16, %c0_17, %c8] : memref<1x8x48xbf16, #tpu.memory_space<vmem>>, vector<1x8x8xbf16>
    %30 = vector.shape_cast %29 : vector<1x8x8xbf16> to vector<8x8xbf16>
    %31 = arith.extf %30 : vector<8x8xbf16> to vector<8x8xf32>
    %c0_18 = arith.constant 0 : index
    %c8_19 = arith.constant 8 : index
    %32 = vector.load %arg3[%c0_18, %c8_19] : memref<1x16xf32, #tpu.memory_space<vmem>>, vector<1x8xf32>
    %33 = vector.broadcast %32 : vector<1x8xf32> to vector<8x8xf32>
    %34 = arith.addf %31, %33 : vector<8x8xf32>
    %35 = arith.truncf %34 : vector<8x8xf32> to vector<8x8xbf16>
    %c0_20 = arith.constant 0 : index
    %c0_21 = arith.constant 0 : index
    %c24 = arith.constant 24 : index
    %36 = vector.load %arg1[%c0_20, %c0_21, %c24] : memref<1x8x48xbf16, #tpu.memory_space<vmem>>, vector<1x8x8xbf16>
    %37 = vector.shape_cast %36 : vector<1x8x8xbf16> to vector<8x8xbf16>
    %c0_22 = arith.constant 0 : index
    %c0_23 = arith.constant 0 : index
    %c40 = arith.constant 40 : index
    %38 = vector.load %arg1[%c0_22, %c0_23, %c40] : memref<1x8x48xbf16, #tpu.memory_space<vmem>>, vector<1x8x8xbf16>
    %39 = vector.shape_cast %38 : vector<1x8x8xbf16> to vector<8x8xbf16>
    %cst_24 = arith.constant dense<0.000000e+00> : vector<8x8xf32>
    %40 = tpu.matmul %35, %37, %cst_24 {dimension_numbers = #tpu.dot_dimension_numbers<[1], [1], [0], [0], [0, 0, 1, 0], [], []>} : vector<8x8xbf16>, vector<8x8xbf16>, vector<8x8xf32> -> vector<8x8xf32>
    %c0_25 = arith.constant 0 : index
    %c1 = arith.constant 1 : index
    %c0_26 = arith.constant 0 : index
    %c0_27 = arith.constant 0 : index
    %41 = vector.load %arg2[%c0_25, %c1, %c0_26, %c0_27] : memref<1x2x8x8xf32, #tpu.memory_space<vmem>>, vector<1x1x8x8xf32>
    %42 = vector.shape_cast %41 : vector<1x1x8x8xf32> to vector<8x8xf32>
    %43 = arith.addf %40, %42 : vector<8x8xf32>
    %cst_28 = arith.constant 0.353553385 : f32
    %44 = vector.broadcast %cst_28 : f32 to vector<8x8xf32>
    %45 = arith.mulf %43, %44 : vector<8x8xf32>
    %cst_29 = arith.constant dense<0xFF800000> : vector<8xf32>
    %46 = vector.multi_reduction <maximumf>, %45, %cst_29 [1] : vector<8x8xf32> to vector<8xf32>
    %47 = vector.shape_cast %46 : vector<8xf32> to vector<8x1xf32>
    %48 = vector.broadcast %47 : vector<8x1xf32> to vector<8x8xf32>
    %49 = arith.subf %45, %48 : vector<8x8xf32>
    %50 = math.exp %49 : vector<8x8xf32>
    %cst_30 = arith.constant dense<0.000000e+00> : vector<8xf32>
    %51 = vector.multi_reduction <add>, %50, %cst_30 [1] : vector<8x8xf32> to vector<8xf32>
    %52 = vector.shape_cast %51 : vector<8xf32> to vector<8x1xf32>
    %53 = tpu.reciprocal %52 {approx = true} : vector<8x1xf32> -> vector<8x1xf32>
    %54 = vector.broadcast %53 : vector<8x1xf32> to vector<8x8xf32>
    %55 = arith.mulf %50, %54 : vector<8x8xf32>
    %56 = arith.truncf %55 : vector<8x8xf32> to vector<8x8xbf16>
    %cst_31 = arith.constant dense<0.000000e+00> : vector<8x8xf32>
    %57 = tpu.matmul %56, %39, %cst_31 {dimension_numbers = #tpu.dot_dimension_numbers<[1], [0], [0], [1], [0, 0, 1, 1], [], []>} : vector<8x8xbf16>, vector<8x8xbf16>, vector<8x8xf32> -> vector<8x8xf32>
    %58 = tpu.concatenate %28, %57 in 1 : vector<8x8xf32>, vector<8x8xf32> -> vector<8x16xf32>
    %59 = arith.truncf %58 : vector<8x16xf32> to vector<8x16xbf16>
    %c0_32 = arith.constant 0 : index
    %c0_33 = arith.constant 0 : index
    %c0_34 = arith.constant 0 : index
    %60 = vector.load %arg4[%c0_32, %c0_33, %c0_34] : memref<1x8x16xbf16, #tpu.memory_space<vmem>>, vector<1x8x16xbf16>
    %61 = vector.shape_cast %60 : vector<1x8x16xbf16> to vector<8x16xbf16>
    %62 = vector.shape_cast %59 : vector<8x16xbf16> to vector<1x8x16xbf16>
    tpu.vector_store %arg4[%c0_32, %c0_33, %c0_34], %62 {strides = array<i32>} : memref<1x8x16xbf16, #tpu.memory_space<vmem>>, vector<1x8x16xbf16>,
    return
  }
  func.func @transform_0(%arg0: i32) -> (i32, i32, i32) {
    %c0_i32 = arith.constant 0 : i32
    %c0_i32_0 = arith.constant 0 : i32
    %c0_i32_1 = arith.constant 0 : i32
    return %arg0, %c0_i32, %c0_i32_0 : i32, i32, i32
  }
  func.func @transform_1(%arg0: i32) -> (i32, i32, i32, i32) {
    %c0_i32 = arith.constant 0 : i32
    %c0_i32_0 = arith.constant 0 : i32
    %c0_i32_1 = arith.constant 0 : i32
    %c0_i32_2 = arith.constant 0 : i32
    return %arg0, %c0_i32, %c0_i32_0, %c0_i32_1 : i32, i32, i32, i32
  }
  func.func @transform_2(%arg0: i32) -> (i32, i32) {
    %c0_i32 = arith.constant 0 : i32
    %c0_i32_0 = arith.constant 0 : i32
    %c0_i32_1 = arith.constant 0 : i32
    return %c0_i32, %c0_i32_0 : i32, i32
  }
  func.func @transform_3(%arg0: i32) -> (i32, i32, i32) {
    %c0_i32 = arith.constant 0 : i32
    %c0_i32_0 = arith.constant 0 : i32
    %c0_i32_1 = arith.constant 0 : i32
    return %arg0, %c0_i32, %c0_i32_0 : i32, i32, i32
  }
}

module attributes {stable_mosaic.version = 11 : i64} {
  func.func @_out_ln_kernel(%arg0: i32, %arg1: memref<16x16xbf16, #tpu.memory_space<vmem>>, %arg2: memref<16x32xbf16, #tpu.memory_space<vmem>>, %arg3: memref<16x32xf32, #tpu.memory_space<vmem>>, %arg4: memref<1x32xf32, #tpu.memory_space<vmem>>, %arg5: memref<1x32xf32, #tpu.memory_space<vmem>>, %arg6: memref<16x32xf32, #tpu.memory_space<vmem>>) attributes {dimension_semantics = [#tpu.dimension_semantics<parallel>], iteration_bounds = array<i64: 1>, scalar_prefetch = 0 : i64, scratch_operands = 0 : i64, tpu.core_type = #tpu.core_type<tc>, window_params = [{transform_indices = @transform_0, window_bounds = array<i64: 16, 16>}, {pipeline_mode = #tpu.pipeline_mode<synchronous>, transform_indices = @transform_1, window_bounds = array<i64: 16, 32>}, {transform_indices = @transform_2, window_bounds = array<i64: 16, 32>}, {pipeline_mode = #tpu.pipeline_mode<synchronous>, transform_indices = @transform_3, window_bounds = array<i64: 1, 32>}, {pipeline_mode = #tpu.pipeline_mode<synchronous>, transform_indices = @transform_4, window_bounds = array<i64: 1, 32>}, {transform_indices = @transform_5, window_bounds = array<i64: 16, 32>}]} {
    %c0 = arith.constant 0 : index
    %c0_0 = arith.constant 0 : index
    %0 = vector.load %arg1[%c0, %c0_0] : memref<16x16xbf16, #tpu.memory_space<vmem>>, vector<16x16xbf16>
    %c0_1 = arith.constant 0 : index
    %c0_2 = arith.constant 0 : index
    %1 = vector.load %arg2[%c0_1, %c0_2] : memref<16x32xbf16, #tpu.memory_space<vmem>>, vector<16x32xbf16>
    %cst = arith.constant dense<0.000000e+00> : vector<16x32xf32>
    %2 = tpu.matmul %0, %1, %cst {dimension_numbers = #tpu.dot_dimension_numbers<[1], [0], [0], [1], [0, 0, 1, 1], [], []>} : vector<16x16xbf16>, vector<16x32xbf16>, vector<16x32xf32> -> vector<16x32xf32>
    %c0_3 = arith.constant 0 : index
    %c0_4 = arith.constant 0 : index
    %3 = vector.load %arg3[%c0_3, %c0_4] : memref<16x32xf32, #tpu.memory_space<vmem>>, vector<16x32xf32>
    %4 = arith.addf %2, %3 : vector<16x32xf32>
    %cst_5 = arith.constant dense<0.000000e+00> : vector<16xf32>
    %5 = vector.multi_reduction <add>, %4, %cst_5 [1] : vector<16x32xf32> to vector<16xf32>
    %6 = vector.shape_cast %5 : vector<16xf32> to vector<16x1xf32>
    %cst_6 = arith.constant 3.200000e+01 : f32
    %7 = vector.broadcast %cst_6 : f32 to vector<16x1xf32>
    %8 = arith.divf %6, %7 : vector<16x1xf32>
    %9 = vector.broadcast %8 : vector<16x1xf32> to vector<16x32xf32>
    %10 = arith.subf %4, %9 : vector<16x32xf32>
    %11 = arith.mulf %10, %10 : vector<16x32xf32>
    %cst_7 = arith.constant dense<0.000000e+00> : vector<16xf32>
    %12 = vector.multi_reduction <add>, %11, %cst_7 [1] : vector<16x32xf32> to vector<16xf32>
    %13 = vector.shape_cast %12 : vector<16xf32> to vector<16x1xf32>
    %cst_8 = arith.constant 3.200000e+01 : f32
    %14 = vector.broadcast %cst_8 : f32 to vector<16x1xf32>
    %15 = arith.divf %13, %14 : vector<16x1xf32>
    %16 = vector.broadcast %8 : vector<16x1xf32> to vector<16x32xf32>
    %17 = arith.subf %4, %16 : vector<16x32xf32>
    %cst_9 = arith.constant 9.99999974E-6 : f32
    %18 = vector.broadcast %cst_9 : f32 to vector<16x1xf32>
    %19 = arith.addf %15, %18 : vector<16x1xf32>
    %20 = math.rsqrt %19 : vector<16x1xf32>
    %21 = vector.broadcast %20 : vector<16x1xf32> to vector<16x32xf32>
    %22 = arith.mulf %17, %21 : vector<16x32xf32>
    %c0_10 = arith.constant 0 : index
    %c0_11 = arith.constant 0 : index
    %23 = vector.load %arg4[%c0_10, %c0_11] : memref<1x32xf32, #tpu.memory_space<vmem>>, vector<1x32xf32>
    %24 = vector.broadcast %23 : vector<1x32xf32> to vector<16x32xf32>
    %25 = arith.mulf %22, %24 : vector<16x32xf32>
    %c0_12 = arith.constant 0 : index
    %c0_13 = arith.constant 0 : index
    %26 = vector.load %arg5[%c0_12, %c0_13] : memref<1x32xf32, #tpu.memory_space<vmem>>, vector<1x32xf32>
    %27 = vector.broadcast %26 : vector<1x32xf32> to vector<16x32xf32>
    %28 = arith.addf %25, %27 : vector<16x32xf32>
    %c0_14 = arith.constant 0 : index
    %c0_15 = arith.constant 0 : index
    %29 = vector.load %arg6[%c0_14, %c0_15] : memref<16x32xf32, #tpu.memory_space<vmem>>, vector<16x32xf32>
    tpu.vector_store %arg6[%c0_14, %c0_15], %28 {strides = array<i32>} : memref<16x32xf32, #tpu.memory_space<vmem>>, vector<16x32xf32>,
    return
  }
  func.func @transform_0(%arg0: i32) -> (i32, i32) {
    %c0_i32 = arith.constant 0 : i32
    %c0_i32_0 = arith.constant 0 : i32
    return %arg0, %c0_i32 : i32, i32
  }
  func.func @transform_1(%arg0: i32) -> (i32, i32) {
    %c0_i32 = arith.constant 0 : i32
    %c0_i32_0 = arith.constant 0 : i32
    %c0_i32_1 = arith.constant 0 : i32
    return %c0_i32, %c0_i32_0 : i32, i32
  }
  func.func @transform_2(%arg0: i32) -> (i32, i32) {
    %c0_i32 = arith.constant 0 : i32
    %c0_i32_0 = arith.constant 0 : i32
    return %arg0, %c0_i32 : i32, i32
  }
  func.func @transform_3(%arg0: i32) -> (i32, i32) {
    %c0_i32 = arith.constant 0 : i32
    %c0_i32_0 = arith.constant 0 : i32
    %c0_i32_1 = arith.constant 0 : i32
    return %c0_i32, %c0_i32_0 : i32, i32
  }
  func.func @transform_4(%arg0: i32) -> (i32, i32) {
    %c0_i32 = arith.constant 0 : i32
    %c0_i32_0 = arith.constant 0 : i32
    %c0_i32_1 = arith.constant 0 : i32
    return %c0_i32, %c0_i32_0 : i32, i32
  }
  func.func @transform_5(%arg0: i32) -> (i32, i32) {
    %c0_i32 = arith.constant 0 : i32
    %c0_i32_0 = arith.constant 0 : i32
    return %arg0, %c0_i32 : i32, i32
  }
}

module attributes {stable_mosaic.version = 11 : i64} {
  func.func @_ffn_kernel(%arg0: i32, %arg1: memref<16x32xf32, #tpu.memory_space<vmem>>, %arg2: memref<32x64xbf16, #tpu.memory_space<vmem>>, %arg3: memref<1x64xf32, #tpu.memory_space<vmem>>, %arg4: memref<64x32xbf16, #tpu.memory_space<vmem>>, %arg5: memref<1x32xf32, #tpu.memory_space<vmem>>, %arg6: memref<1x32xf32, #tpu.memory_space<vmem>>, %arg7: memref<1x32xf32, #tpu.memory_space<vmem>>, %arg8: memref<16x32xf32, #tpu.memory_space<vmem>>) attributes {dimension_semantics = [#tpu.dimension_semantics<parallel>], iteration_bounds = array<i64: 1>, scalar_prefetch = 0 : i64, scratch_operands = 0 : i64, tpu.core_type = #tpu.core_type<tc>, window_params = [{transform_indices = @transform_0, window_bounds = array<i64: 16, 32>}, {pipeline_mode = #tpu.pipeline_mode<synchronous>, transform_indices = @transform_1, window_bounds = array<i64: 32, 64>}, {pipeline_mode = #tpu.pipeline_mode<synchronous>, transform_indices = @transform_2, window_bounds = array<i64: 1, 64>}, {pipeline_mode = #tpu.pipeline_mode<synchronous>, transform_indices = @transform_3, window_bounds = array<i64: 64, 32>}, {pipeline_mode = #tpu.pipeline_mode<synchronous>, transform_indices = @transform_4, window_bounds = array<i64: 1, 32>}, {pipeline_mode = #tpu.pipeline_mode<synchronous>, transform_indices = @transform_5, window_bounds = array<i64: 1, 32>}, {pipeline_mode = #tpu.pipeline_mode<synchronous>, transform_indices = @transform_6, window_bounds = array<i64: 1, 32>}, {transform_indices = @transform_7, window_bounds = array<i64: 16, 32>}]} {
    %c0 = arith.constant 0 : index
    %c0_0 = arith.constant 0 : index
    %0 = vector.load %arg1[%c0, %c0_0] : memref<16x32xf32, #tpu.memory_space<vmem>>, vector<16x32xf32>
    %1 = arith.truncf %0 : vector<16x32xf32> to vector<16x32xbf16>
    %c0_1 = arith.constant 0 : index
    %c0_2 = arith.constant 0 : index
    %2 = vector.load %arg2[%c0_1, %c0_2] : memref<32x64xbf16, #tpu.memory_space<vmem>>, vector<32x64xbf16>
    %cst = arith.constant dense<0.000000e+00> : vector<16x64xf32>
    %3 = tpu.matmul %1, %2, %cst {dimension_numbers = #tpu.dot_dimension_numbers<[1], [0], [0], [1], [0, 0, 1, 1], [], []>} : vector<16x32xbf16>, vector<32x64xbf16>, vector<16x64xf32> -> vector<16x64xf32>
    %c0_3 = arith.constant 0 : index
    %c0_4 = arith.constant 0 : index
    %4 = vector.load %arg3[%c0_3, %c0_4] : memref<1x64xf32, #tpu.memory_space<vmem>>, vector<1x64xf32>
    %5 = vector.broadcast %4 : vector<1x64xf32> to vector<16x64xf32>
    %6 = arith.addf %3, %5 : vector<16x64xf32>
    %cst_5 = arith.constant 0.000000e+00 : f32
    %7 = vector.broadcast %cst_5 : f32 to vector<16x64xf32>
    %8 = arith.maximumf %6, %7 : vector<16x64xf32>
    %9 = arith.truncf %8 : vector<16x64xf32> to vector<16x64xbf16>
    %c0_6 = arith.constant 0 : index
    %c0_7 = arith.constant 0 : index
    %10 = vector.load %arg4[%c0_6, %c0_7] : memref<64x32xbf16, #tpu.memory_space<vmem>>, vector<64x32xbf16>
    %cst_8 = arith.constant dense<0.000000e+00> : vector<16x32xf32>
    %11 = tpu.matmul %9, %10, %cst_8 {dimension_numbers = #tpu.dot_dimension_numbers<[1], [0], [0], [1], [0, 0, 1, 1], [], []>} : vector<16x64xbf16>, vector<64x32xbf16>, vector<16x32xf32> -> vector<16x32xf32>
    %c0_9 = arith.constant 0 : index
    %c0_10 = arith.constant 0 : index
    %12 = vector.load %arg5[%c0_9, %c0_10] : memref<1x32xf32, #tpu.memory_space<vmem>>, vector<1x32xf32>
    %13 = vector.broadcast %12 : vector<1x32xf32> to vector<16x32xf32>
    %14 = arith.addf %11, %13 : vector<16x32xf32>
    %15 = arith.addf %14, %0 : vector<16x32xf32>
    %cst_11 = arith.constant dense<0.000000e+00> : vector<16xf32>
    %16 = vector.multi_reduction <add>, %15, %cst_11 [1] : vector<16x32xf32> to vector<16xf32>
    %17 = vector.shape_cast %16 : vector<16xf32> to vector<16x1xf32>
    %cst_12 = arith.constant 3.200000e+01 : f32
    %18 = vector.broadcast %cst_12 : f32 to vector<16x1xf32>
    %19 = arith.divf %17, %18 : vector<16x1xf32>
    %20 = vector.broadcast %19 : vector<16x1xf32> to vector<16x32xf32>
    %21 = arith.subf %15, %20 : vector<16x32xf32>
    %22 = arith.mulf %21, %21 : vector<16x32xf32>
    %cst_13 = arith.constant dense<0.000000e+00> : vector<16xf32>
    %23 = vector.multi_reduction <add>, %22, %cst_13 [1] : vector<16x32xf32> to vector<16xf32>
    %24 = vector.shape_cast %23 : vector<16xf32> to vector<16x1xf32>
    %cst_14 = arith.constant 3.200000e+01 : f32
    %25 = vector.broadcast %cst_14 : f32 to vector<16x1xf32>
    %26 = arith.divf %24, %25 : vector<16x1xf32>
    %27 = vector.broadcast %19 : vector<16x1xf32> to vector<16x32xf32>
    %28 = arith.subf %15, %27 : vector<16x32xf32>
    %cst_15 = arith.constant 9.99999974E-6 : f32
    %29 = vector.broadcast %cst_15 : f32 to vector<16x1xf32>
    %30 = arith.addf %26, %29 : vector<16x1xf32>
    %31 = math.rsqrt %30 : vector<16x1xf32>
    %32 = vector.broadcast %31 : vector<16x1xf32> to vector<16x32xf32>
    %33 = arith.mulf %28, %32 : vector<16x32xf32>
    %c0_16 = arith.constant 0 : index
    %c0_17 = arith.constant 0 : index
    %34 = vector.load %arg6[%c0_16, %c0_17] : memref<1x32xf32, #tpu.memory_space<vmem>>, vector<1x32xf32>
    %35 = vector.broadcast %34 : vector<1x32xf32> to vector<16x32xf32>
    %36 = arith.mulf %33, %35 : vector<16x32xf32>
    %c0_18 = arith.constant 0 : index
    %c0_19 = arith.constant 0 : index
    %37 = vector.load %arg7[%c0_18, %c0_19] : memref<1x32xf32, #tpu.memory_space<vmem>>, vector<1x32xf32>
    %38 = vector.broadcast %37 : vector<1x32xf32> to vector<16x32xf32>
    %39 = arith.addf %36, %38 : vector<16x32xf32>
    %c0_20 = arith.constant 0 : index
    %c0_21 = arith.constant 0 : index
    %40 = vector.load %arg8[%c0_20, %c0_21] : memref<16x32xf32, #tpu.memory_space<vmem>>, vector<16x32xf32>
    tpu.vector_store %arg8[%c0_20, %c0_21], %39 {strides = array<i32>} : memref<16x32xf32, #tpu.memory_space<vmem>>, vector<16x32xf32>,
    return
  }
  func.func @transform_0(%arg0: i32) -> (i32, i32) {
    %c0_i32 = arith.constant 0 : i32
    %c0_i32_0 = arith.constant 0 : i32
    return %arg0, %c0_i32 : i32, i32
  }
  func.func @transform_1(%arg0: i32) -> (i32, i32) {
    %c0_i32 = arith.constant 0 : i32
    %c0_i32_0 = arith.constant 0 : i32
    %c0_i32_1 = arith.constant 0 : i32
    return %c0_i32, %c0_i32_0 : i32, i32
  }
  func.func @transform_2(%arg0: i32) -> (i32, i32) {
    %c0_i32 = arith.constant 0 : i32
    %c0_i32_0 = arith.constant 0 : i32
    %c0_i32_1 = arith.constant 0 : i32
    return %c0_i32, %c0_i32_0 : i32, i32
  }
  func.func @transform_3(%arg0: i32) -> (i32, i32) {
    %c0_i32 = arith.constant 0 : i32
    %c0_i32_0 = arith.constant 0 : i32
    %c0_i32_1 = arith.constant 0 : i32
    return %c0_i32, %c0_i32_0 : i32, i32
  }
  func.func @transform_4(%arg0: i32) -> (i32, i32) {
    %c0_i32 = arith.constant 0 : i32
    %c0_i32_0 = arith.constant 0 : i32
    %c0_i32_1 = arith.constant 0 : i32
    return %c0_i32, %c0_i32_0 : i32, i32
  }
  func.func @transform_5(%arg0: i32) -> (i32, i32) {
    %c0_i32 = arith.constant 0 : i32
    %c0_i32_0 = arith.constant 0 : i32
    %c0_i32_1 = arith.constant 0 : i32
    return %c0_i32, %c0_i32_0 : i32, i32
  }
  func.func @transform_6(%arg0: i32) -> (i32, i32) {
    %c0_i32 = arith.constant 0 : i32
    %c0_i32_0 = arith.constant 0 : i32
    %c0_i32_1 = arith.constant 0 : i32
    return %c0_i32, %c0_i32_0 : i32, i32
  }
  func.func @transform_7(%arg0: i32) -> (i32, i32) {
    %c0_i32 = arith.constant 0 : i32
    %c0_i32_0 = arith.constant 0 : i32
    return %arg0, %c0_i32 : i32, i32
  }
}

</mosaic_0001>

<llo_original>
// kernel: rel_partial_decoder_layer.6
$region0: #{rel_partial_decoder_layer.6}
  #allocation0 [shape = 'u32[]', space=smem, size = 0x4, offset = 0x4, fixed_abs, tag = 'smem constant byte address 0x4 - core index']
  #allocation1 [shape = 'u32[144,128]{1,0:T(1,128)}', space=vmem, size = 0x12000, scoped, tag = 'internal scratch']
  %s0 = inlined_call_operand.vmem [shape: bf16[16,32], index: 0, kind: input, shape index: {}]
  %s1 = inlined_call_operand.vmem [shape: bf16[32,48], index: 1, kind: input, shape index: {}]
  %s2 = inlined_call_operand.vmem [shape: bf16[16,48], index: 2, kind: output, shape index: {}]
  %s3 = sld [smem:[#allocation0]]
  $region18: #{rel_partial_decoder_layer.6} parent=0
    _
  %s5 = ssub.s32 1, %s3
  %s6 = scalar_select 0, %s5, %s3
  // Predicated region
  $region2: #{rel_partial_decoder_layer.6} parent=0 // pred_check
    _
  $region3: #{rel_partial_decoder_layer.6} parent=0 // pred_check_branch
    %8 = sbr.rel (0) target = $region5
  $region4: #{rel_partial_decoder_layer.6} parent=0 // pred_region
    _
  $region5: #{rel_partial_decoder_layer.6} parent=0 // pred_fallthru
    _
  // Predicated region
  $region6: #{rel_partial_decoder_layer.6} parent=0 // pred_check
    _
  $region7: #{rel_partial_decoder_layer.6} parent=0 // pred_check_branch
    %10 = sbr.rel (0) target = $region9
  $region8: #{rel_partial_decoder_layer.6} parent=0 // pred_region
    _
  $region9: #{rel_partial_decoder_layer.6} parent=0 // pred_fallthru
    _
  %v12 = vld [vmem:[%s0] sm:$0xf]
  %v13 = vld [vmem:[%s0 + $0x4] sm:$0xf]
  %v14 = vld [vmem:[%s1] sm:$0xf]
  %v15 = vld [vmem:[%s1 + $0x4] sm:$0xf]
  %v16 = vld [vmem:[%s1 + $0x8] sm:$0xf]
  %v17 = vld [vmem:[%s1 + $0xc] sm:$0xf]
  %v20 = vunpack.c.l.b16 %v12
  %v21 = vunpack.c.l.b16 %v13
  %v22 = vpack.c.b16 %v21, %v20
  %v27 = vunpack.c.l.b16 %v14
  %v28 = vunpack.c.l.b16 %v15
  %v29 = vunpack.c.l.b16 %v16
  %v30 = vunpack.c.l.b16 %v17
  %v31 = vpack.c.b16 %v28, %v27
  %v32 = vpack.c.b16 %v30, %v29
  %vm35 = vcmask 261120
  %v37 = vsel %vm35, %v22, 0
  %39 = vmatprep.subr.bf16.mxu0 0
  %40 = vmatpush1.bf16.msra.mxu0 0
  %41 = vmatprep.subr.bf16.mxu0 0
  %42 = vmatpush1.bf16.msra.mxu0 0
  %43 = vmatprep.subr.bf16.mxu0 0
  %44 = vmatpush1.bf16.msra.mxu0 0
  %45 = vmatprep.subr.bf16.mxu0 0
  %46 = vmatpush1.bf16.msra.mxu0 0
  %47 = vmatprep.subr.bf16.mxu0 0
  %48 = vmatpush1.bf16.msra.mxu0 0
  %49 = vmatprep.subr.bf16.mxu0 0
  %50 = vmatpush1.bf16.msra.mxu0 0
  %51 = vmatprep.subr.bf16.mxu0 0
  %52 = vmatpush1.bf16.msra.mxu0 %v32
  %53 = vmatprep.subr.bf16.mxu0 0
  %54 = vmatpush1.bf16.msra.mxu0 %v31
  %55 = vmatprep.subr.bf16.mxu0 0
  %56 = vmatpush2.bf16.msra.mxu0 0
  %57 = vmatprep.subr.bf16.mxu0 0
  %58 = vmatpush2.bf16.msra.mxu0 0
  %59 = vmatprep.subr.bf16.mxu0 0
  %60 = vmatpush2.bf16.msra.mxu0 0
  %61 = vmatprep.subr.bf16.mxu0 0
  %62 = vmatpush2.bf16.msra.mxu0 0
  %63 = vmatprep.subr.bf16.mxu0 0
  %64 = vmatpush2.bf16.msra.mxu0 0
  %65 = vmatprep.subr.bf16.mxu0 0
  %66 = vmatpush2.bf16.msra.mxu0 0
  %67 = vmatprep.subr.bf16.mxu0 0
  %68 = vmatpush2.bf16.msra.mxu0 0
  %69 = vmatprep.subr.bf16.mxu0 0
  %70 = vmatpush2.bf16.msra.mxu0 0
  %71 = vmatprep.mubr.bf16.mxu0 0
  %72 = vmatmul.mubr.bf16.gmra.mxu0 %v37
  %v73 = vpop.f32.mrf.mxu0
  %v74 = vadd.f32 0.0, %v73
  %v75 = vpop.f32.mrf.mxu0
  %v76 = vpop.f32.mrf.mxu0
  %v77 = vadd.f32 0.0, %v76
  %v78 = vpop.f32.mrf.mxu0
  %79 = vdwg.mxu0
  %v80 = vpack.c.bf16 %v77, %v74
  %v82 = vunpack.c.l.b16 %v80
  %v83 = vunpack.c.h.b16 %v80
  %v84 = vpack.c.b16 %v82, %v82
  %v85 = vpack.c.b16 %v83, %v83
  %vm88 = vcmask 388096
  %89 = vst.msk [vmem:[%s2] sm:$0xf] %vm88, %v84
  %90 = vst.msk [vmem:[%s2 + $0x4] sm:$0xf] %vm88, %v85
  // Predicated region
  $region10: #{rel_partial_decoder_layer.6} parent=0 // pred_check
    _
  $region11: #{rel_partial_decoder_layer.6} parent=0 // pred_check_branch
    %92 = sbr.rel (0) target = $region13
  $region12: #{rel_partial_decoder_layer.6} parent=0 // pred_region
    _
  $region13: #{rel_partial_decoder_layer.6} parent=0 // pred_fallthru
    _
  // Predicated region
  $region14: #{rel_partial_decoder_layer.6} parent=0 // pred_check
    _
  $region15: #{rel_partial_decoder_layer.6} parent=0 // pred_check_branch
    %94 = sbr.rel (0) target = $region17
  $region16: #{rel_partial_decoder_layer.6} parent=0 // pred_region
    _
  $region17: #{rel_partial_decoder_layer.6} parent=0 // pred_fallthru
    _

// kernel: rel_partial_decoder_layer.7
$region0: #{rel_partial_decoder_layer.7}
  #allocation0 [shape = 'u32[]', space=smem, size = 0x4, offset = 0x4, fixed_abs, tag = 'smem constant byte address 0x4 - core index']
  #allocation1 [shape = 'u32[144,128]{1,0:T(1,128)}', space=vmem, size = 0x12000, scoped, tag = 'internal scratch']
  %s0 = inlined_call_operand.vmem [shape: bf16[8,32], index: 0, kind: input, shape index: {}]
  %s1 = inlined_call_operand.vmem [shape: bf16[32,16], index: 1, kind: input, shape index: {}]
  %s2 = inlined_call_operand.vmem [shape: bf16[8,16], index: 2, kind: output, shape index: {}]
  %s3 = sld [smem:[#allocation0]]
  $region18: #{rel_partial_decoder_layer.7} parent=0
    _
  %s5 = ssub.s32 1, %s3
  %s6 = scalar_select 0, %s5, %s3
  // Predicated region
  $region2: #{rel_partial_decoder_layer.7} parent=0 // pred_check
    _
  $region3: #{rel_partial_decoder_layer.7} parent=0 // pred_check_branch
    %8 = sbr.rel (0) target = $region5
  $region4: #{rel_partial_decoder_layer.7} parent=0 // pred_region
    _
  $region5: #{rel_partial_decoder_layer.7} parent=0 // pred_fallthru
    _
  // Predicated region
  $region6: #{rel_partial_decoder_layer.7} parent=0 // pred_check
    _
  $region7: #{rel_partial_decoder_layer.7} parent=0 // pred_check_branch
    %10 = sbr.rel (0) target = $region9
  $region8: #{rel_partial_decoder_layer.7} parent=0 // pred_region
    _
  $region9: #{rel_partial_decoder_layer.7} parent=0 // pred_fallthru
    _
  %v12 = vld [vmem:[%s0] sm:$0xf]
  %v13 = vld [vmem:[%s1] sm:$0xf]
  %v14 = vld [vmem:[%s1 + $0x4] sm:$0xf]
  %v15 = vld [vmem:[%s1 + $0x8] sm:$0xf]
  %v16 = vld [vmem:[%s1 + $0xc] sm:$0xf]
  %v21 = vunpack.c.l.b16 %v13
  %v22 = vunpack.c.l.b16 %v14
  %v23 = vunpack.c.l.b16 %v15
  %v24 = vunpack.c.l.b16 %v16
  %v25 = vpack.c.b16 %v22, %v21
  %v26 = vpack.c.b16 %v24, %v23
  %vm29 = vcmask 261120
  %v31 = vsel %vm29, %v12, 0
  %33 = vmatprep.subr.bf16.mxu0 0
  %34 = vmatpush1.bf16.msra.mxu0 0
  %35 = vmatprep.subr.bf16.mxu0 0
  %36 = vmatpush1.bf16.msra.mxu0 0
  %37 = vmatprep.subr.bf16.mxu0 0
  %38 = vmatpush1.bf16.msra.mxu0 0
  %39 = vmatprep.subr.bf16.mxu0 0
  %40 = vmatpush1.bf16.msra.mxu0 0
  %41 = vmatprep.subr.bf16.mxu0 0
  %42 = vmatpush1.bf16.msra.mxu0 0
  %43 = vmatprep.subr.bf16.mxu0 0
  %44 = vmatpush1.bf16.msra.mxu0 0
  %45 = vmatprep.subr.bf16.mxu0 0
  %46 = vmatpush1.bf16.msra.mxu0 %v26
  %47 = vmatprep.subr.bf16.mxu0 0
  %48 = vmatpush1.bf16.msra.mxu0 %v25
  %49 = vmatprep.subr.bf16.mxu0 0
  %50 = vmatpush2.bf16.msra.mxu0 0
  %51 = vmatprep.subr.bf16.mxu0 0
  %52 = vmatpush2.bf16.msra.mxu0 0
  %53 = vmatprep.subr.bf16.mxu0 0
  %54 = vmatpush2.bf16.msra.mxu0 0
  %55 = vmatprep.subr.bf16.mxu0 0
  %56 = vmatpush2.bf16.msra.mxu0 0
  %57 = vmatprep.subr.bf16.mxu0 0
  %58 = vmatpush2.bf16.msra.mxu0 0
  %59 = vmatprep.subr.bf16.mxu0 0
  %60 = vmatpush2.bf16.msra.mxu0 0
  %61 = vmatprep.subr.bf16.mxu0 0
  %62 = vmatpush2.bf16.msra.mxu0 0
  %63 = vmatprep.subr.bf16.mxu0 0
  %64 = vmatpush2.bf16.msra.mxu0 0
  %65 = vmatprep.mubr.bf16.mxu0 0
  %66 = vmatmul.mubr.bf16.gmra.mxu0 %v31
  %v67 = vpop.f32.mrf.mxu0
  %v68 = vadd.f32 0.0, %v67
  %v69 = vpop.f32.mrf.mxu0
  %v70 = vpop.f32.mrf.mxu0
  %v71 = vpop.f32.mrf.mxu0
  %72 = vdwg.mxu0
  %v73 = vpack.c.bf16 %v68, %v68
  %vm74 = vcmask 125952
  %75 = vst.msk [vmem:[%s2] sm:$0xf] %vm74, %v73
  // Predicated region
  $region10: #{rel_partial_decoder_layer.7} parent=0 // pred_check
    _
  $region11: #{rel_partial_decoder_layer.7} parent=0 // pred_check_branch
    %77 = sbr.rel (0) target = $region13
  $region12: #{rel_partial_decoder_layer.7} parent=0 // pred_region
    _
  $region13: #{rel_partial_decoder_layer.7} parent=0 // pred_fallthru
    _
  // Predicated region
  $region14: #{rel_partial_decoder_layer.7} parent=0 // pred_check
    _
  $region15: #{rel_partial_decoder_layer.7} parent=0 // pred_check_branch
    %79 = sbr.rel (0) target = $region17
  $region16: #{rel_partial_decoder_layer.7} parent=0 // pred_region
    _
  $region17: #{rel_partial_decoder_layer.7} parent=0 // pred_fallthru
    _

// kernel: rel_partial_decoder_layer.8
$region0: #{rel_partial_decoder_layer.8}
  #allocation0 [shape = 'u32[]', space=smem, size = 0x4, offset = 0x4, fixed_abs, tag = 'smem constant byte address 0x4 - core index']
  #allocation1 [shape = 'u32[144,128]{1,0:T(1,128)}', space=vmem, size = 0x12000, scoped, tag = 'internal scratch']
  %s0 = inlined_call_operand.vmem [shape: bf16[2,8,48], index: 0, kind: input, shape index: {}]
  %s1 = inlined_call_operand.vmem [shape: bf16[8,16], index: 1, kind: input, shape index: {}]
  %s2 = inlined_call_operand.vmem [shape: f32[1,16], index: 2, kind: input, shape index: {}]
  %s3 = inlined_call_operand.vmem [shape: f32[2,2,8,8], index: 3, kind: output, shape index: {}]
  %s4 = sld [smem:[#allocation0]]
  $region45: #{rel_partial_decoder_layer.8} parent=0
    _
  %s6 = ssub.s32 1, %s4
  %s7 = scalar_select 0, %s6, %s4
  loop: start=0, step=1, limit=4
  $region2: #{rel_partial_decoder_layer.8} parent=0 // loop_pre_header
    _
  $region3: #{rel_partial_decoder_layer.8} parent=0 // loop_header
    %s9 = sphi 0, %s13
    %p10 = scmp.ge.s32.totalorder %s9, 4
    %s19 = sphi 0, %s21
    %s22 = sphi 0, %s19
    %s23 = sphi 0, %s22
    %s39 = sphi 0, %s23
    %s43 = sphi 0, %s43
    %s45 = sphi 0, %s43
    %s46 = sphi 0, %s45
    %s60 = sphi 0, %s46
    %s64 = sphi 0, %s64
    %s66 = sphi 0, %s64
    %s67 = sphi 0, %s66
    %s81 = sphi 0, %s67
    %s87 = sphi 0, %s89
    %s90 = sphi 0, %s87
    %s91 = sphi 0, %s90
    %s107 = sphi 0, %s91
  $region4: #{rel_partial_decoder_layer.8} parent=0 // loop_header_branch
    %12 = sbr.rel (%p10) target = $region8
  $region5: #{rel_partial_decoder_layer.8} parent=0 // loop_body
    %s14 = ssub.s32 %s9, 1
    %s15 = ssub.s32 %s9, 2
    %s16 = sadd.s32 %s9, 1
    %s17 = ssub.s32 %s9, %s16
    %p18 = scmp.eq.s32.totalorder %s17, 0
    %s20 = sadd.s32 %s19, 1
    %s21 = scalar_select %p18, %s19, %s20
    %p24 = pneg %p18
    %p25 = scmp.eq.s32.totalorder %s9, 1
    %p26 = por %p24, %p25
    %p27 = scmp.ne.s32.totalorder %s19, %s22
    %p28 = scmp.eq.s32.totalorder %s9, 0
    %p29 = por %p27, %p28
    %p30 = scmp.ne.s32.totalorder %s19, %s22
    %p31 = scmp.eq.s32.totalorder %s14, 1
    %p32 = por %p30, %p31
    %p33 = scmp.ne.s32.totalorder %s22, %s23
    %p34 = scmp.eq.s32.totalorder %s14, 0
    %p35 = por %p33, %p34
    %p36 = scmp.ne.s32.totalorder %s22, %s23
    %p37 = scmp.eq.s32.totalorder %s15, 1
    %p38 = por %p36, %p37
    %p40 = scmp.ne.s32.totalorder %s23, %s39
    %p41 = scmp.eq.s32.totalorder %s15, 0
    %p42 = por %p40, %p41
    %s44 = sadd.s32 %s43, 1
    %p47 = scmp.eq.s32.totalorder %s9, 1
    %p48 = scmp.ne.s32.totalorder %s43, %s45
    %p49 = scmp.eq.s32.totalorder %s9, 0
    %p50 = por %p48, %p49
    %p51 = scmp.ne.s32.totalorder %s43, %s45
    %p52 = scmp.eq.s32.totalorder %s14, 1
    %p53 = por %p51, %p52
    %p54 = scmp.ne.s32.totalorder %s45, %s46
    %p55 = scmp.eq.s32.totalorder %s14, 0
    %p56 = por %p54, %p55
    %p57 = scmp.ne.s32.totalorder %s45, %s46
    %p58 = scmp.eq.s32.totalorder %s15, 1
    %p59 = por %p57, %p58
    %p61 = scmp.ne.s32.totalorder %s46, %s60
    %p62 = scmp.eq.s32.totalorder %s15, 0
    %p63 = por %p61, %p62
    %s65 = sadd.s32 %s64, 1
    %p68 = scmp.eq.s32.totalorder %s9, 1
    %p69 = scmp.ne.s32.totalorder %s64, %s66
    %p70 = scmp.eq.s32.totalorder %s9, 0
    %p71 = por %p69, %p70
    %p72 = scmp.ne.s32.totalorder %s64, %s66
    %p73 = scmp.eq.s32.totalorder %s14, 1
    %p74 = por %p72, %p73
    %p75 = scmp.ne.s32.totalorder %s66, %s67
    %p76 = scmp.eq.s32.totalorder %s14, 0
    %p77 = por %p75, %p76
    %p78 = scmp.ne.s32.totalorder %s66, %s67
    %p79 = scmp.eq.s32.totalorder %s15, 1
    %p80 = por %p78, %p79
    %p82 = scmp.ne.s32.totalorder %s67, %s81
    %p83 = scmp.eq.s32.totalorder %s15, 0
    %p84 = por %p82, %p83
    %s85 = ssub.s32 %s9, %s16
    %p86 = scmp.eq.s32.totalorder %s85, 0
    %s88 = sadd.s32 %s87, 1
    %s89 = scalar_select %p86, %s87, %s88
    %p92 = pneg %p86
    %p93 = scmp.eq.s32.totalorder %s9, 1
    %p94 = por %p92, %p93
    %p95 = scmp.ne.s32.totalorder %s87, %s90
    %p96 = scmp.eq.s32.totalorder %s9, 0
    %p97 = por %p95, %p96
    %p98 = scmp.ne.s32.totalorder %s87, %s90
    %p99 = scmp.eq.s32.totalorder %s14, 1
    %p100 = por %p98, %p99
    %p101 = scmp.ne.s32.totalorder %s90, %s91
    %p102 = scmp.eq.s32.totalorder %s14, 0
    %p103 = por %p101, %p102
    %p104 = scmp.ne.s32.totalorder %s90, %s91
    %p105 = scmp.eq.s32.totalorder %s15, 1
    %p106 = por %p104, %p105
    %p108 = scmp.ne.s32.totalorder %s91, %s107
    %p109 = scmp.eq.s32.totalorder %s15, 0
    %p110 = por %p108, %p109
    %p111 = scmp.le.s32.totalorder 1, %s9
    %p112 = scmp.lt.s32.totalorder %s9, 3
    %p113 = pnand %p111, %p112
    %p114 = pneg %p113
    // Predicated region
    $region9: #{rel_partial_decoder_layer.8} parent=5 // pred_check
      _
    $region10: #{rel_partial_decoder_layer.8} parent=5 // pred_check_branch
      %116 = sbr.rel (%p113) target = $region12
    $region11: #{rel_partial_decoder_layer.8} parent=5 // pred_region
      %s117 = ssub.s32 %s9, 1
      // Predicated region
      $region13: #{rel_partial_decoder_layer.8} parent=11 // pred_check
        %p118 = pneg %p56
      $region14: #{rel_partial_decoder_layer.8} parent=11 // pred_check_branch
        %120 = sbr.rel (%p118) target = $region16
      $region15: #{rel_partial_decoder_layer.8} parent=11 // pred_region
        _
      $region16: #{rel_partial_decoder_layer.8} parent=11 // pred_fallthru
        _
      // Predicated region
      $region17: #{rel_partial_decoder_layer.8} parent=11 // pred_check
        %p121 = pneg %p77
      $region18: #{rel_partial_decoder_layer.8} parent=11 // pred_check_branch
        %123 = sbr.rel (%p121) target = $region20
      $region19: #{rel_partial_decoder_layer.8} parent=11 // pred_region
        _
      $region20: #{rel_partial_decoder_layer.8} parent=11 // pred_fallthru
        _
    $region12: #{rel_partial_decoder_layer.8} parent=5 // pred_fallthru
      _
    %p124 = scmp.lt.s32.totalorder %s9, 2
    // Predicated region
    $region21: #{rel_partial_decoder_layer.8} parent=5 // pred_check
      %p125 = pneg %p124
    $region22: #{rel_partial_decoder_layer.8} parent=5 // pred_check_branch
      %127 = sbr.rel (%p125) target = $region24
    $region23: #{rel_partial_decoder_layer.8} parent=5 // pred_region
      // Predicated region
      $region25: #{rel_partial_decoder_layer.8} parent=23 // pred_check
        %p128 = pneg %p29
      $region26: #{rel_partial_decoder_layer.8} parent=23 // pred_check_branch
        %130 = sbr.rel (%p128) target = $region28
      $region27: #{rel_partial_decoder_layer.8} parent=23 // pred_region
        %p131 = scmp.lt.s32.totalorder %s9, 1
        %s132 = scalar_select %p131, %s9, 1
        %s133 = smul.addr %s132, 4
        %s134 = scalar_lea.vmem %s0, %s133
      $region28: #{rel_partial_decoder_layer.8} parent=23 // pred_fallthru
        _
    $region24: #{rel_partial_decoder_layer.8} parent=5 // pred_fallthru
      _
    %p135 = scmp.le.s32.totalorder 1, %s9
    %p136 = scmp.lt.s32.totalorder %s9, 3
    %p137 = pnand %p135, %p136
    %p138 = pneg %p137
    // Predicated region
    $region29: #{rel_partial_decoder_layer.8} parent=5 // pred_check
      _
    $region30: #{rel_partial_decoder_layer.8} parent=5 // pred_check_branch
      %140 = sbr.rel (%p137) target = $region32
    $region31: #{rel_partial_decoder_layer.8} parent=5 // pred_region
      %s141 = ssub.s32 %s9, 1
      %p142 = scmp.lt.s32.totalorder %s14, 1
      %s143 = scalar_select %p142, %s14, 1
      %s144 = smul.addr %s143, 4
      %s145 = scalar_lea.vmem %s0, %s144
      %p146 = pneg %p35
      %p147 = pneg %p32
      %p148 = pneg %p56
      %p149 = pneg %p53
      %p150 = pneg %p77
      %p151 = pneg %p74
      %p152 = pneg %p103
      %p153 = pneg %p100
      %p154 = scmp.lt.s32.totalorder %s14, 1
      %s155 = scalar_select %p154, %s14, 1
      %s156 = smul.addr %s155, 2
      %s157 = smul.addr %s156, 8
      %s158 = scalar_lea.vmem %s3, %s157
      %p159 = scmp.lt.s32.totalorder %s14, 1
      %s160 = scalar_select %p159, %s14, 1
      %s161 = smul.addr %s160, 4
      %s162 = scalar_lea.vmem %s0, %s161
      %p163 = scmp.lt.s32.totalorder %s14, 1
      %s164 = scalar_select %p163, %s14, 1
      %s165 = smul.addr %s164, 2
      %s166 = smul.addr %s165, 8
      %s167 = scalar_lea.vmem %s3, %s166
      %v169 = vld [vmem:[%s162] sm:$0xf]
      %v170 = vunpack.c.l.bf16 %v169
      %v171 = vld [vmem:[%s2] sm:$0x1]
      %v173 = vlaneseq
      %v174 = vshrl.u32 %v173, 7
      %v175 = vsub.s32 0, %v174
      %v176 = vrot.slane %v171, %v175
      %v178 = vadd.f32 %v170, %v176
      %v179 = vpack.c.bf16 %v178, %v178
      %v180 = vld [vmem:[%s1] sm:$0xf]
      %vm181 = vcmask 64512
      %v183 = vsel %vm181, %v179, 0
      %v186 = vsel %vm181, %v180, 0
      %188 = vmatprep.subr.bf16.mxu0 0
      %189 = vmatpush1.bf16.xpose.msra.mxu0 0
      %190 = vmatprep.subr.bf16.mxu0 0
      %191 = vmatpush1.bf16.xpose.msra.mxu0 0
      %192 = vmatprep.subr.bf16.mxu0 0
      %193 = vmatpush1.bf16.xpose.msra.mxu0 0
      %194 = vmatprep.subr.bf16.mxu0 0
      %195 = vmatpush1.bf16.xpose.msra.mxu0 0
      %196 = vmatprep.subr.bf16.mxu0 0
      %197 = vmatpush1.bf16.xpose.msra.mxu0 0
      %198 = vmatprep.subr.bf16.mxu0 0
      %199 = vmatpush1.bf16.xpose.msra.mxu0 0
      %200 = vmatprep.subr.bf16.mxu0 0
      %201 = vmatpush1.bf16.xpose.msra.mxu0 0
      %202 = vmatprep.subr.bf16.mxu0 0
      %203 = vmatpush1.bf16.xpose.msra.mxu0 %v186
      %204 = vmatprep.subr.bf16.mxu0 0
      %205 = vmatpush2.bf16.xpose.msra.mxu0 0
      %206 = vmatprep.subr.bf16.mxu0 0
      %207 = vmatpush2.bf16.xpose.msra.mxu0 0
      %208 = vmatprep.subr.bf16.mxu0 0
      %209 = vmatpush2.bf16.xpose.msra.mxu0 0
      %210 = vmatprep.subr.bf16.mxu0 0
      %211 = vmatpush2.bf16.xpose.msra.mxu0 0
      %212 = vmatprep.subr.bf16.mxu0 0
      %213 = vmatpush2.bf16.xpose.msra.mxu0 0
      %214 = vmatprep.subr.bf16.mxu0 0
      %215 = vmatpush2.bf16.xpose.msra.mxu0 0
      %216 = vmatprep.subr.bf16.mxu0 0
      %217 = vmatpush2.bf16.xpose.msra.mxu0 0
      %218 = vmatprep.subr.bf16.mxu0 0
      %219 = vmatpush2.bf16.xpose.msra.mxu0 0
      %220 = vmatprep.mubr.bf16.mxu0 0
      %221 = vmatmul.mubr.bf16.gmra.mxu0 %v183
      %v222 = vpop.f32.mrf.mxu0
      %v223 = vadd.f32 0.0, %v222
      %v224 = vpop.f32.mrf.mxu0
      %v225 = vpop.f32.mrf.mxu0
      %v226 = vpop.f32.mrf.mxu0
      %227 = vdwg.mxu0
      %228 = vst.msk [vmem:[%s167] sm:$0xff] %vm181, %v223
      %v229 = vld [vmem:[%s162] sm:$0xf]
      %v230 = vunpack.c.l.bf16 %v229
      %v231 = vld [vmem:[%s2] sm:$0x1]
      %v233 = vlaneseq
      %v234 = vshrl.u32 %v233, 7
      %v235 = vsub.s32 0, %v234
      %v236 = vrot.slane %v231, %v235
      %v238 = vadd.f32 %v230, %v236
      %v239 = vpack.c.bf16 %v238, %v238
      %v240 = vld [vmem:[%s1] sm:$0xf]
      %242 = vrot.lane.b32.xlu0 %v239, 120
      %v243 = vpop.permute.xlu0 %242
      %v245 = vunpack.c.l.b16 %v240
      %v246 = vpack.c.b16 %v245, %v245
      %247 = vrot.lane.b32.xlu0 %v246, 120
      %v248 = vpop.permute.xlu0 %247
      %v250 = vsel %vm181, %v243, 0
      %v253 = vsel %vm181, %v248, 0
      %255 = vmatprep.subr.bf16.mxu0 0
      %256 = vmatpush1.bf16.xpose.msra.mxu0 0
      %257 = vmatprep.subr.bf16.mxu0 0
      %258 = vmatpush1.bf16.xpose.msra.mxu0 0
      %259 = vmatprep.subr.bf16.mxu0 0
      %260 = vmatpush1.bf16.xpose.msra.mxu0 0
      %261 = vmatprep.subr.bf16.mxu0 0
      %262 = vmatpush1.bf16.xpose.msra.mxu0 0
      %263 = vmatprep.subr.bf16.mxu0 0
      %264 = vmatpush1.bf16.xpose.msra.mxu0 0
      %265 = vmatprep.subr.bf16.mxu0 0
      %266 = vmatpush1.bf16.xpose.msra.mxu0 0
      %267 = vmatprep.subr.bf16.mxu0 0
      %268 = vmatpush1.bf16.xpose.msra.mxu0 0
      %269 = vmatprep.subr.bf16.mxu0 0
      %270 = vmatpush1.bf16.xpose.msra.mxu0 %v253
      %271 = vmatprep.subr.bf16.mxu0 0
      %272 = vmatpush2.bf16.xpose.msra.mxu0 0
      %273 = vmatprep.subr.bf16.mxu0 0
      %274 = vmatpush2.bf16.xpose.msra.mxu0 0
      %275 = vmatprep.subr.bf16.mxu0 0
      %276 = vmatpush2.bf16.xpose.msra.mxu0 0
      %277 = vmatprep.subr.bf16.mxu0 0
      %278 = vmatpush2.bf16.xpose.msra.mxu0 0
      %279 = vmatprep.subr.bf16.mxu0 0
      %280 = vmatpush2.bf16.xpose.msra.mxu0 0
      %281 = vmatprep.subr.bf16.mxu0 0
      %282 = vmatpush2.bf16.xpose.msra.mxu0 0
      %283 = vmatprep.subr.bf16.mxu0 0
      %284 = vmatpush2.bf16.xpose.msra.mxu0 0
      %285 = vmatprep.subr.bf16.mxu0 0
      %286 = vmatpush2.bf16.xpose.msra.mxu0 0
      %287 = vmatprep.mubr.bf16.mxu0 0
      %288 = vmatmul.mubr.bf16.gmra.mxu0 %v250
      %v289 = vpop.f32.mrf.mxu0
      %v290 = vadd.f32 0.0, %v289
      %v291 = vpop.f32.mrf.mxu0
      %v292 = vpop.f32.mrf.mxu0
      %v293 = vpop.f32.mrf.mxu0
      %294 = vdwg.mxu0
      %s295 = scalar_lea.vmem %s167, 8
      %296 = vst.msk [vmem:[%s295] sm:$0xff] %vm181, %v290
      %p297 = scmp.lt.s32.totalorder %s14, 1
      %s298 = scalar_select %p297, %s14, 1
      %s299 = smul.addr %s298, 2
      %s300 = smul.addr %s299, 8
      %s301 = scalar_lea.vmem %s3, %s300
      // Predicated region
      $region33: #{rel_partial_decoder_layer.8} parent=31 // pred_check
        %p302 = pneg %p100
      $region34: #{rel_partial_decoder_layer.8} parent=31 // pred_check_branch
        %304 = sbr.rel (%p302) target = $region36
      $region35: #{rel_partial_decoder_layer.8} parent=31 // pred_region
        _
      $region36: #{rel_partial_decoder_layer.8} parent=31 // pred_fallthru
        _
    $region32: #{rel_partial_decoder_layer.8} parent=5 // pred_fallthru
      _
    %p305 = scmp.le.s32.totalorder 2, %s9
    // Predicated region
    $region37: #{rel_partial_decoder_layer.8} parent=5 // pred_check
      %p306 = pneg %p305
    $region38: #{rel_partial_decoder_layer.8} parent=5 // pred_check_branch
      %308 = sbr.rel (%p306) target = $region40
    $region39: #{rel_partial_decoder_layer.8} parent=5 // pred_region
      %s309 = ssub.s32 %s9, 2
      // Predicated region
      $region41: #{rel_partial_decoder_layer.8} parent=39 // pred_check
        %p310 = pneg %p106
      $region42: #{rel_partial_decoder_layer.8} parent=39 // pred_check_branch
        %312 = sbr.rel (%p310) target = $region44
      $region43: #{rel_partial_decoder_layer.8} parent=39 // pred_region
        %p313 = scmp.lt.s32.totalorder %s15, 1
        %s314 = scalar_select %p313, %s15, 1
        %s315 = smul.addr %s314, 2
        %s316 = smul.addr %s315, 8
        %s317 = scalar_lea.vmem %s3, %s316
      $region44: #{rel_partial_decoder_layer.8} parent=39 // pred_fallthru
        _
    $region40: #{rel_partial_decoder_layer.8} parent=5 // pred_fallthru
      _
  $region6: #{rel_partial_decoder_layer.8} parent=0 // loop_footer
    %s13 = sadd.s32 1, %s9
  $region7: #{rel_partial_decoder_layer.8} parent=0 // loop_footer_branch
    %8 = sbr.rel target = $region3
  $region8: #{rel_partial_decoder_layer.8} parent=0 // loop_exit
    _

// kernel: rel_partial_decoder_layer.9
$region0: #{rel_partial_decoder_layer.9}
  #allocation0 [shape = 'u32[]', space=smem, size = 0x4, offset = 0x4, fixed_abs, tag = 'smem constant byte address 0x4 - core index']
  #allocation1 [shape = 'u32[144,128]{1,0:T(1,128)}', space=vmem, size = 0x12000, scoped, tag = 'internal scratch']
  %s0 = inlined_call_operand.vmem [shape: bf16[2,8,48], index: 0, kind: input, shape index: {}]
  %s1 = inlined_call_operand.vmem [shape: f32[2,2,8,8], index: 1, kind: input, shape index: {}]
  %s2 = inlined_call_operand.vmem [shape: f32[1,16], index: 2, kind: input, shape index: {}]
  %s3 = inlined_call_operand.vmem [shape: bf16[2,8,16], index: 3, kind: output, shape index: {}]
  %s4 = sld [smem:[#allocation0]]
  $region45: #{rel_partial_decoder_layer.9} parent=0
    _
  %s6 = ssub.s32 1, %s4
  %s7 = scalar_select 0, %s6, %s4
  loop: start=0, step=1, limit=4
  $region2: #{rel_partial_decoder_layer.9} parent=0 // loop_pre_header
    _
  $region3: #{rel_partial_decoder_layer.9} parent=0 // loop_header
    %s9 = sphi 0, %s13
    %p10 = scmp.ge.s32.totalorder %s9, 4
    %s19 = sphi 0, %s21
    %s22 = sphi 0, %s19
    %s23 = sphi 0, %s22
    %s39 = sphi 0, %s23
    %s45 = sphi 0, %s47
    %s48 = sphi 0, %s45
    %s49 = sphi 0, %s48
    %s65 = sphi 0, %s49
    %s69 = sphi 0, %s69
    %s71 = sphi 0, %s69
    %s72 = sphi 0, %s71
    %s86 = sphi 0, %s72
    %s92 = sphi 0, %s94
    %s95 = sphi 0, %s92
    %s96 = sphi 0, %s95
    %s112 = sphi 0, %s96
  $region4: #{rel_partial_decoder_layer.9} parent=0 // loop_header_branch
    %12 = sbr.rel (%p10) target = $region8
  $region5: #{rel_partial_decoder_layer.9} parent=0 // loop_body
    %s14 = ssub.s32 %s9, 1
    %s15 = ssub.s32 %s9, 2
    %s16 = sadd.s32 %s9, 1
    %s17 = ssub.s32 %s9, %s16
    %p18 = scmp.eq.s32.totalorder %s17, 0
    %s20 = sadd.s32 %s19, 1
    %s21 = scalar_select %p18, %s19, %s20
    %p24 = pneg %p18
    %p25 = scmp.eq.s32.totalorder %s9, 1
    %p26 = por %p24, %p25
    %p27 = scmp.ne.s32.totalorder %s19, %s22
    %p28 = scmp.eq.s32.totalorder %s9, 0
    %p29 = por %p27, %p28
    %p30 = scmp.ne.s32.totalorder %s19, %s22
    %p31 = scmp.eq.s32.totalorder %s14, 1
    %p32 = por %p30, %p31
    %p33 = scmp.ne.s32.totalorder %s22, %s23
    %p34 = scmp.eq.s32.totalorder %s14, 0
    %p35 = por %p33, %p34
    %p36 = scmp.ne.s32.totalorder %s22, %s23
    %p37 = scmp.eq.s32.totalorder %s15, 1
    %p38 = por %p36, %p37
    %p40 = scmp.ne.s32.totalorder %s23, %s39
    %p41 = scmp.eq.s32.totalorder %s15, 0
    %p42 = por %p40, %p41
    %s43 = ssub.s32 %s9, %s16
    %p44 = scmp.eq.s32.totalorder %s43, 0
    %s46 = sadd.s32 %s45, 1
    %s47 = scalar_select %p44, %s45, %s46
    %p50 = pneg %p44
    %p51 = scmp.eq.s32.totalorder %s9, 1
    %p52 = por %p50, %p51
    %p53 = scmp.ne.s32.totalorder %s45, %s48
    %p54 = scmp.eq.s32.totalorder %s9, 0
    %p55 = por %p53, %p54
    %p56 = scmp.ne.s32.totalorder %s45, %s48
    %p57 = scmp.eq.s32.totalorder %s14, 1
    %p58 = por %p56, %p57
    %p59 = scmp.ne.s32.totalorder %s48, %s49
    %p60 = scmp.eq.s32.totalorder %s14, 0
    %p61 = por %p59, %p60
    %p62 = scmp.ne.s32.totalorder %s48, %s49
    %p63 = scmp.eq.s32.totalorder %s15, 1
    %p64 = por %p62, %p63
    %p66 = scmp.ne.s32.totalorder %s49, %s65
    %p67 = scmp.eq.s32.totalorder %s15, 0
    %p68 = por %p66, %p67
    %s70 = sadd.s32 %s69, 1
    %p73 = scmp.eq.s32.totalorder %s9, 1
    %p74 = scmp.ne.s32.totalorder %s69, %s71
    %p75 = scmp.eq.s32.totalorder %s9, 0
    %p76 = por %p74, %p75
    %p77 = scmp.ne.s32.totalorder %s69, %s71
    %p78 = scmp.eq.s32.totalorder %s14, 1
    %p79 = por %p77, %p78
    %p80 = scmp.ne.s32.totalorder %s71, %s72
    %p81 = scmp.eq.s32.totalorder %s14, 0
    %p82 = por %p80, %p81
    %p83 = scmp.ne.s32.totalorder %s71, %s72
    %p84 = scmp.eq.s32.totalorder %s15, 1
    %p85 = por %p83, %p84
    %p87 = scmp.ne.s32.totalorder %s72, %s86
    %p88 = scmp.eq.s32.totalorder %s15, 0
    %p89 = por %p87, %p88
    %s90 = ssub.s32 %s9, %s16
    %p91 = scmp.eq.s32.totalorder %s90, 0
    %s93 = sadd.s32 %s92, 1
    %s94 = scalar_select %p91, %s92, %s93
    %p97 = pneg %p91
    %p98 = scmp.eq.s32.totalorder %s9, 1
    %p99 = por %p97, %p98
    %p100 = scmp.ne.s32.totalorder %s92, %s95
    %p101 = scmp.eq.s32.totalorder %s9, 0
    %p102 = por %p100, %p101
    %p103 = scmp.ne.s32.totalorder %s92, %s95
    %p104 = scmp.eq.s32.totalorder %s14, 1
    %p105 = por %p103, %p104
    %p106 = scmp.ne.s32.totalorder %s95, %s96
    %p107 = scmp.eq.s32.totalorder %s14, 0
    %p108 = por %p106, %p107
    %p109 = scmp.ne.s32.totalorder %s95, %s96
    %p110 = scmp.eq.s32.totalorder %s15, 1
    %p111 = por %p109, %p110
    %p113 = scmp.ne.s32.totalorder %s96, %s112
    %p114 = scmp.eq.s32.totalorder %s15, 0
    %p115 = por %p113, %p114
    %p116 = scmp.le.s32.totalorder 1, %s9
    %p117 = scmp.lt.s32.totalorder %s9, 3
    %p118 = pnand %p116, %p117
    %p119 = pneg %p118
    // Predicated region
    $region9: #{rel_partial_decoder_layer.9} parent=5 // pred_check
      _
    $region10: #{rel_partial_decoder_layer.9} parent=5 // pred_check_branch
      %121 = sbr.rel (%p118) target = $region12
    $region11: #{rel_partial_decoder_layer.9} parent=5 // pred_region
      %s122 = ssub.s32 %s9, 1
      // Predicated region
      $region13: #{rel_partial_decoder_layer.9} parent=11 // pred_check
        %p123 = pneg %p82
      $region14: #{rel_partial_decoder_layer.9} parent=11 // pred_check_branch
        %125 = sbr.rel (%p123) target = $region16
      $region15: #{rel_partial_decoder_layer.9} parent=11 // pred_region
        _
      $region16: #{rel_partial_decoder_layer.9} parent=11 // pred_fallthru
        _
    $region12: #{rel_partial_decoder_layer.9} parent=5 // pred_fallthru
      _
    %p126 = scmp.lt.s32.totalorder %s9, 2
    // Predicated region
    $region17: #{rel_partial_decoder_layer.9} parent=5 // pred_check
      %p127 = pneg %p126
    $region18: #{rel_partial_decoder_layer.9} parent=5 // pred_check_branch
      %129 = sbr.rel (%p127) target = $region20
    $region19: #{rel_partial_decoder_layer.9} parent=5 // pred_region
      // Predicated region
      $region21: #{rel_partial_decoder_layer.9} parent=19 // pred_check
        %p130 = pneg %p29
      $region22: #{rel_partial_decoder_layer.9} parent=19 // pred_check_branch
        %132 = sbr.rel (%p130) target = $region24
      $region23: #{rel_partial_decoder_layer.9} parent=19 // pred_region
        %p133 = scmp.lt.s32.totalorder %s9, 1
        %s134 = scalar_select %p133, %s9, 1
        %s135 = smul.addr %s134, 4
        %s136 = scalar_lea.vmem %s0, %s135
      $region24: #{rel_partial_decoder_layer.9} parent=19 // pred_fallthru
        _
      // Predicated region
      $region25: #{rel_partial_decoder_layer.9} parent=19 // pred_check
        %p137 = pneg %p55
      $region26: #{rel_partial_decoder_layer.9} parent=19 // pred_check_branch
        %139 = sbr.rel (%p137) target = $region28
      $region27: #{rel_partial_decoder_layer.9} parent=19 // pred_region
        %p140 = scmp.lt.s32.totalorder %s9, 1
        %s141 = scalar_select %p140, %s9, 1
        %s142 = smul.addr %s141, 2
        %s143 = smul.addr %s142, 8
        %s144 = scalar_lea.vmem %s1, %s143
      $region28: #{rel_partial_decoder_layer.9} parent=19 // pred_fallthru
        _
    $region20: #{rel_partial_decoder_layer.9} parent=5 // pred_fallthru
      _
    %p145 = scmp.le.s32.totalorder 1, %s9
    %p146 = scmp.lt.s32.totalorder %s9, 3
    %p147 = pnand %p145, %p146
    %p148 = pneg %p147
    // Predicated region
    $region29: #{rel_partial_decoder_layer.9} parent=5 // pred_check
      _
    $region30: #{rel_partial_decoder_layer.9} parent=5 // pred_check_branch
      %150 = sbr.rel (%p147) target = $region32
    $region31: #{rel_partial_decoder_layer.9} parent=5 // pred_region
      %s151 = ssub.s32 %s9, 1
      %p152 = scmp.lt.s32.totalorder %s14, 1
      %s153 = scalar_select %p152, %s14, 1
      %s154 = smul.addr %s153, 4
      %s155 = scalar_lea.vmem %s0, %s154
      %p156 = pneg %p35
      %p157 = pneg %p32
      %p158 = scmp.lt.s32.totalorder %s14, 1
      %s159 = scalar_select %p158, %s14, 1
      %s160 = smul.addr %s159, 2
      %s161 = smul.addr %s160, 8
      %s162 = scalar_lea.vmem %s1, %s161
      %p163 = pneg %p61
      %p164 = pneg %p58
      %p165 = pneg %p82
      %p166 = pneg %p79
      %p167 = pneg %p108
      %p168 = pneg %p105
      %p169 = scmp.lt.s32.totalorder %s14, 1
      %s170 = scalar_select %p169, %s14, 1
      %s171 = smul.addr %s170, 4
      %s172 = scalar_lea.vmem %s3, %s171
      %p173 = scmp.lt.s32.totalorder %s14, 1
      %s174 = scalar_select %p173, %s14, 1
      %s175 = smul.addr %s174, 4
      %s176 = scalar_lea.vmem %s0, %s175
      %p177 = scmp.lt.s32.totalorder %s14, 1
      %s178 = scalar_select %p177, %s14, 1
      %s179 = smul.addr %s178, 2
      %s180 = smul.addr %s179, 8
      %s181 = scalar_lea.vmem %s1, %s180
      %p182 = scmp.lt.s32.totalorder %s14, 1
      %s183 = scalar_select %p182, %s14, 1
      %s184 = smul.addr %s183, 4
      %s185 = scalar_lea.vmem %s3, %s184
      %v187 = vld [vmem:[%s176] sm:$0xf]
      %v188 = vunpack.c.l.bf16 %v187
      %v189 = vld [vmem:[%s2] sm:$0x1]
      %v191 = vlaneseq
      %v192 = vshrl.u32 %v191, 7
      %v193 = vsub.s32 0, %v192
      %v194 = vrot.slane %v189, %v193
      %v196 = vadd.f32 %v188, %v194
      %v197 = vpack.c.bf16 %v196, %v196
      %v198 = vld [vmem:[%s181] sm:$0xff]
      %v200 = vunpack.c.l.b16 %v187
      %v201 = vpack.c.b16 %v200, %v200
      %202 = vrot.lane.b32.xlu0 %v201, 112
      %v203 = vpop.permute.xlu0 %202
      %vm204 = vcmask 64512
      %v206 = vsel %vm204, %v197, 0
      %v209 = vsel %vm204, %v203, 0
      %211 = vmatprep.subr.bf16.mxu0 0
      %212 = vmatpush1.bf16.xpose.msra.mxu0 0
      %213 = vmatprep.subr.bf16.mxu0 0
      %214 = vmatpush1.bf16.xpose.msra.mxu0 0
      %215 = vmatprep.subr.bf16.mxu0 0
      %216 = vmatpush1.bf16.xpose.msra.mxu0 0
      %217 = vmatprep.subr.bf16.mxu0 0
      %218 = vmatpush1.bf16.xpose.msra.mxu0 0
      %219 = vmatprep.subr.bf16.mxu0 0
      %220 = vmatpush1.bf16.xpose.msra.mxu0 0
      %221 = vmatprep.subr.bf16.mxu0 0
      %222 = vmatpush1.bf16.xpose.msra.mxu0 0
      %223 = vmatprep.subr.bf16.mxu0 0
      %224 = vmatpush1.bf16.xpose.msra.mxu0 0
      %225 = vmatprep.subr.bf16.mxu0 0
      %226 = vmatpush1.bf16.xpose.msra.mxu0 %v209
      %227 = vmatprep.subr.bf16.mxu0 0
      %228 = vmatpush2.bf16.xpose.msra.mxu0 0
      %229 = vmatprep.subr.bf16.mxu0 0
      %230 = vmatpush2.bf16.xpose.msra.mxu0 0
      %231 = vmatprep.subr.bf16.mxu0 0
      %232 = vmatpush2.bf16.xpose.msra.mxu0 0
      %233 = vmatprep.subr.bf16.mxu0 0
      %234 = vmatpush2.bf16.xpose.msra.mxu0 0
      %235 = vmatprep.subr.bf16.mxu0 0
      %236 = vmatpush2.bf16.xpose.msra.mxu0 0
      %237 = vmatprep.subr.bf16.mxu0 0
      %238 = vmatpush2.bf16.xpose.msra.mxu0 0
      %239 = vmatprep.subr.bf16.mxu0 0
      %240 = vmatpush2.bf16.xpose.msra.mxu0 0
      %241 = vmatprep.subr.bf16.mxu0 0
      %242 = vmatpush2.bf16.xpose.msra.mxu0 0
      %243 = vmatprep.mubr.bf16.mxu0 0
      %244 = vmatmul.mubr.bf16.gmra.mxu0 %v206
      %v245 = vpop.f32.mrf.mxu0
      %v246 = vadd.f32 %v198, %v245
      %v247 = vpop.f32.mrf.mxu0
      %v248 = vpop.f32.mrf.mxu0
      %v249 = vpop.f32.mrf.mxu0
      %250 = vdwg.mxu0
      %v251 = vmul.f32 %v246, 0.35355338
      %v252 = vsel %vm204, %v251, -inf
      %253 = vmax.xlane.f32.xlu0 %v252
      %v254 = vpop.xlane.xlu0 %253
      %v255 = vsub.f32 %v251, %v254
      %v256 = vmul.f32 %v255, 1.442695
      %v257 = vpow.pop %v256
      %v258 = vsel %vm204, %v257, 0.0
      %259 = vadd.xlane.f32.xlu0 %v258
      %v260 = vpop.xlane.xlu0 %259
      %v261 = vrcp.pop %v260
      %v262 = vmul.f32 %v257, %v261
      %v263 = vpack.c.bf16 %v262, %v262
      %264 = vrot.lane.b32.xlu0 %v201, 96
      %v265 = vpop.permute.xlu0 %264
      %v267 = vsel %vm204, %v263, 0
      %vm269 = vcmask 1043456
      %v271 = vsel %vm269, %v265, 0
      %273 = vmatprep.subr.bf16.mxu0 0
      %274 = vmatpush1.bf16.msra.mxu0 0
      %275 = vmatprep.subr.bf16.mxu0 0
      %276 = vmatpush1.bf16.msra.mxu0 0
      %277 = vmatprep.subr.bf16.mxu0 0
      %278 = vmatpush1.bf16.msra.mxu0 0
      %279 = vmatprep.subr.bf16.mxu0 0
      %280 = vmatpush1.bf16.msra.mxu0 0
      %281 = vmatprep.subr.bf16.mxu0 0
      %282 = vmatpush1.bf16.msra.mxu0 0
      %283 = vmatprep.subr.bf16.mxu0 0
      %284 = vmatpush1.bf16.msra.mxu0 0
      %285 = vmatprep.subr.bf16.mxu0 0
      %286 = vmatpush1.bf16.msra.mxu0 0
      %287 = vmatprep.subr.bf16.mxu0 0
      %288 = vmatpush1.bf16.msra.mxu0 %v271
      %289 = vmatprep.subr.bf16.mxu0 0
      %290 = vmatpush2.bf16.msra.mxu0 0
      %291 = vmatprep.subr.bf16.mxu0 0
      %292 = vmatpush2.bf16.msra.mxu0 0
      %293 = vmatprep.subr.bf16.mxu0 0
      %294 = vmatpush2.bf16.msra.mxu0 0
      %295 = vmatprep.subr.bf16.mxu0 0
      %296 = vmatpush2.bf16.msra.mxu0 0
      %297 = vmatprep.subr.bf16.mxu0 0
      %298 = vmatpush2.bf16.msra.mxu0 0
      %299 = vmatprep.subr.bf16.mxu0 0
      %300 = vmatpush2.bf16.msra.mxu0 0
      %301 = vmatprep.subr.bf16.mxu0 0
      %302 = vmatpush2.bf16.msra.mxu0 0
      %303 = vmatprep.subr.bf16.mxu0 0
      %304 = vmatpush2.bf16.msra.mxu0 0
      %305 = vmatprep.mubr.bf16.mxu0 0
      %306 = vmatmul.mubr.bf16.gmra.mxu0 %v267
      %v307 = vpop.f32.mrf.mxu0
      %v308 = vadd.f32 0.0, %v307
      %v309 = vpop.f32.mrf.mxu0
      %v310 = vpop.f32.mrf.mxu0
      %v311 = vpop.f32.mrf.mxu0
      %312 = vdwg.mxu0
      %s313 = scalar_lea.vmem %s181, 8
      %v314 = vld [vmem:[%s313] sm:$0xff]
      %316 = vrot.lane.b32.xlu0 %v197, 120
      %v317 = vpop.permute.xlu0 %316
      %318 = vrot.lane.b32.xlu0 %v201, 104
      %v319 = vpop.permute.xlu0 %318
      %v321 = vsel %vm204, %v317, 0
      %v324 = vsel %vm204, %v319, 0
      %326 = vmatprep.subr.bf16.mxu0 0
      %327 = vmatpush1.bf16.xpose.msra.mxu0 0
      %328 = vmatprep.subr.bf16.mxu0 0
      %329 = vmatpush1.bf16.xpose.msra.mxu0 0
      %330 = vmatprep.subr.bf16.mxu0 0
      %331 = vmatpush1.bf16.xpose.msra.mxu0 0
      %332 = vmatprep.subr.bf16.mxu0 0
      %333 = vmatpush1.bf16.xpose.msra.mxu0 0
      %334 = vmatprep.subr.bf16.mxu0 0
      %335 = vmatpush1.bf16.xpose.msra.mxu0 0
      %336 = vmatprep.subr.bf16.mxu0 0
      %337 = vmatpush1.bf16.xpose.msra.mxu0 0
      %338 = vmatprep.subr.bf16.mxu0 0
      %339 = vmatpush1.bf16.xpose.msra.mxu0 0
      %340 = vmatprep.subr.bf16.mxu0 0
      %341 = vmatpush1.bf16.xpose.msra.mxu0 %v324
      %342 = vmatprep.subr.bf16.mxu0 0
      %343 = vmatpush2.bf16.xpose.msra.mxu0 0
      %344 = vmatprep.subr.bf16.mxu0 0
      %345 = vmatpush2.bf16.xpose.msra.mxu0 0
      %346 = vmatprep.subr.bf16.mxu0 0
      %347 = vmatpush2.bf16.xpose.msra.mxu0 0
      %348 = vmatprep.subr.bf16.mxu0 0
      %349 = vmatpush2.bf16.xpose.msra.mxu0 0
      %350 = vmatprep.subr.bf16.mxu0 0
      %351 = vmatpush2.bf16.xpose.msra.mxu0 0
      %352 = vmatprep.subr.bf16.mxu0 0
      %353 = vmatpush2.bf16.xpose.msra.mxu0 0
      %354 = vmatprep.subr.bf16.mxu0 0
      %355 = vmatpush2.bf16.xpose.msra.mxu0 0
      %356 = vmatprep.subr.bf16.mxu0 0
      %357 = vmatpush2.bf16.xpose.msra.mxu0 0
      %358 = vmatprep.mubr.bf16.mxu0 0
      %359 = vmatmul.mubr.bf16.gmra.mxu0 %v321
      %v360 = vpop.f32.mrf.mxu0
      %v361 = vadd.f32 %v314, %v360
      %v362 = vpop.f32.mrf.mxu0
      %v363 = vpop.f32.mrf.mxu0
      %v364 = vpop.f32.mrf.mxu0
      %365 = vdwg.mxu0
      %v366 = vmul.f32 %v361, 0.35355338
      %v367 = vsel %vm204, %v366, -inf
      %368 = vmax.xlane.f32.xlu0 %v367
      %v369 = vpop.xlane.xlu0 %368
      %v370 = vsub.f32 %v366, %v369
      %v371 = vmul.f32 %v370, 1.442695
      %v372 = vpow.pop %v371
      %v373 = vsel %vm204, %v372, 0.0
      %374 = vadd.xlane.f32.xlu0 %v373
      %v375 = vpop.xlane.xlu0 %374
      %v376 = vrcp.pop %v375
      %v377 = vmul.f32 %v372, %v376
      %v378 = vpack.c.bf16 %v377, %v377
      %379 = vrot.lane.b32.xlu0 %v201, 88
      %v380 = vpop.permute.xlu0 %379
      %v382 = vsel %vm204, %v378, 0
      %v385 = vsel %vm269, %v380, 0
      %387 = vmatprep.subr.bf16.mxu0 0
      %388 = vmatpush1.bf16.msra.mxu0 0
      %389 = vmatprep.subr.bf16.mxu0 0
      %390 = vmatpush1.bf16.msra.mxu0 0
      %391 = vmatprep.subr.bf16.mxu0 0
      %392 = vmatpush1.bf16.msra.mxu0 0
      %393 = vmatprep.subr.bf16.mxu0 0
      %394 = vmatpush1.bf16.msra.mxu0 0
      %395 = vmatprep.subr.bf16.mxu0 0
      %396 = vmatpush1.bf16.msra.mxu0 0
      %397 = vmatprep.subr.bf16.mxu0 0
      %398 = vmatpush1.bf16.msra.mxu0 0
      %399 = vmatprep.subr.bf16.mxu0 0
      %400 = vmatpush1.bf16.msra.mxu0 0
      %401 = vmatprep.subr.bf16.mxu0 0
      %402 = vmatpush1.bf16.msra.mxu0 %v385
      %403 = vmatprep.subr.bf16.mxu0 0
      %404 = vmatpush2.bf16.msra.mxu0 0
      %405 = vmatprep.subr.bf16.mxu0 0
      %406 = vmatpush2.bf16.msra.mxu0 0
      %407 = vmatprep.subr.bf16.mxu0 0
      %408 = vmatpush2.bf16.msra.mxu0 0
      %409 = vmatprep.subr.bf16.mxu0 0
      %410 = vmatpush2.bf16.msra.mxu0 0
      %411 = vmatprep.subr.bf16.mxu0 0
      %412 = vmatpush2.bf16.msra.mxu0 0
      %413 = vmatprep.subr.bf16.mxu0 0
      %414 = vmatpush2.bf16.msra.mxu0 0
      %415 = vmatprep.subr.bf16.mxu0 0
      %416 = vmatpush2.bf16.msra.mxu0 0
      %417 = vmatprep.subr.bf16.mxu0 0
      %418 = vmatpush2.bf16.msra.mxu0 0
      %419 = vmatprep.mubr.bf16.mxu0 0
      %420 = vmatmul.mubr.bf16.gmra.mxu0 %v382
      %v421 = vpop.f32.mrf.mxu0
      %v422 = vadd.f32 0.0, %v421
      %v423 = vpop.f32.mrf.mxu0
      %v424 = vpop.f32.mrf.mxu0
      %v425 = vpop.f32.mrf.mxu0
      %426 = vdwg.mxu0
      %428 = vrot.lane.b32.xlu0 %v422, 8
      %v429 = vpop.permute.xlu0 %428
      %v431 = vsel %vm204, %v308, %v429
      %v432 = vpack.c.bf16 %v431, %v431
      %vm433 = vcmask 125952
      %434 = vst.msk [vmem:[%s185] sm:$0xf] %vm433, %v432
      %p435 = scmp.lt.s32.totalorder %s14, 1
      %s436 = scalar_select %p435, %s14, 1
      %s437 = smul.addr %s436, 4
      %s438 = scalar_lea.vmem %s3, %s437
      // Predicated region
      $region33: #{rel_partial_decoder_layer.9} parent=31 // pred_check
        %p439 = pneg %p105
      $region34: #{rel_partial_decoder_layer.9} parent=31 // pred_check_branch
        %441 = sbr.rel (%p439) target = $region36
      $region35: #{rel_partial_decoder_layer.9} parent=31 // pred_region
        _
      $region36: #{rel_partial_decoder_layer.9} parent=31 // pred_fallthru
        _
    $region32: #{rel_partial_decoder_layer.9} parent=5 // pred_fallthru
      _
    %p442 = scmp.le.s32.totalorder 2, %s9
    // Predicated region
    $region37: #{rel_partial_decoder_layer.9} parent=5 // pred_check
      %p443 = pneg %p442
    $region38: #{rel_partial_decoder_layer.9} parent=5 // pred_check_branch
      %445 = sbr.rel (%p443) target = $region40
    $region39: #{rel_partial_decoder_layer.9} parent=5 // pred_region
      %s446 = ssub.s32 %s9, 2
      // Predicated region
      $region41: #{rel_partial_decoder_layer.9} parent=39 // pred_check
        %p447 = pneg %p111
      $region42: #{rel_partial_decoder_layer.9} parent=39 // pred_check_branch
        %449 = sbr.rel (%p447) target = $region44
      $region43: #{rel_partial_decoder_layer.9} parent=39 // pred_region
        %p450 = scmp.lt.s32.totalorder %s15, 1
        %s451 = scalar_select %p450, %s15, 1
        %s452 = smul.addr %s451, 4
        %s453 = scalar_lea.vmem %s3, %s452
      $region44: #{rel_partial_decoder_layer.9} parent=39 // pred_fallthru
        _
    $region40: #{rel_partial_decoder_layer.9} parent=5 // pred_fallthru
      _
  $region6: #{rel_partial_decoder_layer.9} parent=0 // loop_footer
    %s13 = sadd.s32 1, %s9
  $region7: #{rel_partial_decoder_layer.9} parent=0 // loop_footer_branch
    %8 = sbr.rel target = $region3
  $region8: #{rel_partial_decoder_layer.9} parent=0 // loop_exit
    _

// kernel: rel_partial_decoder_layer.10
$region0: #{rel_partial_decoder_layer.10}
  #allocation0 [shape = 'u32[]', space=smem, size = 0x4, offset = 0x4, fixed_abs, tag = 'smem constant byte address 0x4 - core index']
  #allocation1 [shape = 'u32[144,128]{1,0:T(1,128)}', space=vmem, size = 0x12000, scoped, tag = 'internal scratch']
  %s0 = inlined_call_operand.vmem [shape: bf16[16,16], index: 0, kind: input, shape index: {}]
  %s1 = inlined_call_operand.vmem [shape: bf16[16,32], index: 1, kind: input, shape index: {}]
  %s2 = inlined_call_operand.vmem [shape: f32[16,32], index: 2, kind: input, shape index: {}]
  %s3 = inlined_call_operand.vmem [shape: f32[1,32], index: 3, kind: input, shape index: {}]
  %s4 = inlined_call_operand.vmem [shape: f32[1,32], index: 4, kind: input, shape index: {}]
  %s5 = inlined_call_operand.vmem [shape: f32[16,32], index: 5, kind: output, shape index: {}]
  %s6 = sld [smem:[#allocation0]]
  $region30: #{rel_partial_decoder_layer.10} parent=0
    _
  %s8 = ssub.s32 1, %s6
  %s9 = scalar_select 0, %s8, %s6
  // Predicated region
  $region2: #{rel_partial_decoder_layer.10} parent=0 // pred_check
    _
  $region3: #{rel_partial_decoder_layer.10} parent=0 // pred_check_branch
    %11 = sbr.rel (0) target = $region5
  $region4: #{rel_partial_decoder_layer.10} parent=0 // pred_region
    _
  $region5: #{rel_partial_decoder_layer.10} parent=0 // pred_fallthru
    _
  // Predicated region
  $region6: #{rel_partial_decoder_layer.10} parent=0 // pred_check
    _
  $region7: #{rel_partial_decoder_layer.10} parent=0 // pred_check_branch
    %13 = sbr.rel (0) target = $region9
  $region8: #{rel_partial_decoder_layer.10} parent=0 // pred_region
    _
  $region9: #{rel_partial_decoder_layer.10} parent=0 // pred_fallthru
    _
  // Predicated region
  $region10: #{rel_partial_decoder_layer.10} parent=0 // pred_check
    _
  $region11: #{rel_partial_decoder_layer.10} parent=0 // pred_check_branch
    %15 = sbr.rel (0) target = $region13
  $region12: #{rel_partial_decoder_layer.10} parent=0 // pred_region
    _
  $region13: #{rel_partial_decoder_layer.10} parent=0 // pred_fallthru
    _
  // Predicated region
  $region14: #{rel_partial_decoder_layer.10} parent=0 // pred_check
    _
  $region15: #{rel_partial_decoder_layer.10} parent=0 // pred_check_branch
    %17 = sbr.rel (0) target = $region17
  $region16: #{rel_partial_decoder_layer.10} parent=0 // pred_region
    _
  $region17: #{rel_partial_decoder_layer.10} parent=0 // pred_fallthru
    _
  // Predicated region
  $region18: #{rel_partial_decoder_layer.10} parent=0 // pred_check
    _
  $region19: #{rel_partial_decoder_layer.10} parent=0 // pred_check_branch
    %19 = sbr.rel (0) target = $region21
  $region20: #{rel_partial_decoder_layer.10} parent=0 // pred_region
    _
  $region21: #{rel_partial_decoder_layer.10} parent=0 // pred_fallthru
    _
  %v21 = vld [vmem:[%s0] sm:$0xf]
  %v22 = vld [vmem:[%s0 + $0x4] sm:$0xf]
  %v23 = vld [vmem:[%s1] sm:$0xf]
  %v24 = vld [vmem:[%s1 + $0x4] sm:$0xf]
  %v25 = vld [vmem:[%s2] sm:$0xff]
  %v26 = vld [vmem:[%s2 + $0x8] sm:$0xff]
  %v29 = vunpack.c.l.b16 %v21
  %v30 = vunpack.c.l.b16 %v22
  %v31 = vpack.c.b16 %v30, %v29
  %v34 = vunpack.c.l.b16 %v23
  %v35 = vunpack.c.l.b16 %v24
  %v36 = vpack.c.b16 %v35, %v34
  %vm38 = vcmask 130048
  %v40 = vsel %vm38, %v31, 0
  %42 = vmatprep.subr.bf16.mxu0 0
  %43 = vmatpush1.bf16.msra.mxu0 0
  %44 = vmatprep.subr.bf16.mxu0 0
  %45 = vmatpush1.bf16.msra.mxu0 0
  %46 = vmatprep.subr.bf16.mxu0 0
  %47 = vmatpush1.bf16.msra.mxu0 0
  %48 = vmatprep.subr.bf16.mxu0 0
  %49 = vmatpush1.bf16.msra.mxu0 0
  %50 = vmatprep.subr.bf16.mxu0 0
  %51 = vmatpush1.bf16.msra.mxu0 0
  %52 = vmatprep.subr.bf16.mxu0 0
  %53 = vmatpush1.bf16.msra.mxu0 0
  %54 = vmatprep.subr.bf16.mxu0 0
  %55 = vmatpush1.bf16.msra.mxu0 0
  %56 = vmatprep.subr.bf16.mxu0 0
  %57 = vmatpush1.bf16.msra.mxu0 %v36
  %58 = vmatprep.subr.bf16.mxu0 0
  %59 = vmatpush2.bf16.msra.mxu0 0
  %60 = vmatprep.subr.bf16.mxu0 0
  %61 = vmatpush2.bf16.msra.mxu0 0
  %62 = vmatprep.subr.bf16.mxu0 0
  %63 = vmatpush2.bf16.msra.mxu0 0
  %64 = vmatprep.subr.bf16.mxu0 0
  %65 = vmatpush2.bf16.msra.mxu0 0
  %66 = vmatprep.subr.bf16.mxu0 0
  %67 = vmatpush2.bf16.msra.mxu0 0
  %68 = vmatprep.subr.bf16.mxu0 0
  %69 = vmatpush2.bf16.msra.mxu0 0
  %70 = vmatprep.subr.bf16.mxu0 0
  %71 = vmatpush2.bf16.msra.mxu0 0
  %72 = vmatprep.subr.bf16.mxu0 0
  %73 = vmatpush2.bf16.msra.mxu0 0
  %74 = vmatprep.mubr.bf16.mxu0 0
  %75 = vmatmul.mubr.bf16.gmra.mxu0 %v40
  %v76 = vpop.f32.mrf.mxu0
  %v77 = vadd.f32 %v25, %v76
  %v78 = vpop.f32.mrf.mxu0
  %v79 = vpop.f32.mrf.mxu0
  %v80 = vadd.f32 %v26, %v79
  %v81 = vpop.f32.mrf.mxu0
  %82 = vdwg.mxu0
  %vm83 = vcmask 261120
  %v84 = vsel %vm83, %v77, 0.0
  %85 = vadd.xlane.f32.xlu0 %v84
  %v86 = vpop.xlane.xlu0 %85
  %v87 = vsel %vm83, %v80, 0.0
  %88 = vadd.xlane.f32.xlu0 %v87
  %v89 = vpop.xlane.xlu0 %88
  %v90 = vrcp.pop 32.0
  %v91 = vmul.f32 %v86, %v90
  %v92 = vmul.f32 %v89, %v90
  %v93 = vsub.f32 %v77, %v91
  %v94 = vsub.f32 %v80, %v92
  %v95 = vmul.f32 %v93, %v93
  %v96 = vmul.f32 %v94, %v94
  %v97 = vsel %vm83, %v95, 0.0
  %98 = vadd.xlane.f32.xlu0 %v97
  %v99 = vpop.xlane.xlu0 %98
  %v100 = vsel %vm83, %v96, 0.0
  %101 = vadd.xlane.f32.xlu0 %v100
  %v102 = vpop.xlane.xlu0 %101
  %v103 = vmul.f32 %v99, %v90
  %v104 = vmul.f32 %v102, %v90
  %v105 = vadd.f32 %v103, 1e-05
  %v106 = vadd.f32 %v104, 1e-05
  %v107 = vrsqrt.pop %v105
  %v108 = vrsqrt.pop %v106
  %v109 = vmul.f32 %v93, %v107
  %v110 = vmul.f32 %v94, %v108
  %v111 = vld [vmem:[%s3] sm:$0x1]
  %v113 = vlaneseq
  %v114 = vshrl.u32 %v113, 7
  %v115 = vsub.s32 0, %v114
  %v116 = vrot.slane %v111, %v115
  %v118 = vmul.f32 %v109, %v116
  %v119 = vmul.f32 %v110, %v116
  %v120 = vld [vmem:[%s4] sm:$0x1]
  %v122 = vlaneseq
  %v123 = vshrl.u32 %v122, 7
  %v124 = vsub.s32 0, %v123
  %v125 = vrot.slane %v120, %v124
  %v127 = vadd.f32 %v118, %v125
  %v128 = vadd.f32 %v119, %v125
  %129 = vst.msk [vmem:[%s5] sm:$0xff] %vm83, %v127
  %130 = vst.msk [vmem:[%s5 + $0x8] sm:$0xff] %vm83, %v128
  // Predicated region
  $region22: #{rel_partial_decoder_layer.10} parent=0 // pred_check
    _
  $region23: #{rel_partial_decoder_layer.10} parent=0 // pred_check_branch
    %132 = sbr.rel (0) target = $region25
  $region24: #{rel_partial_decoder_layer.10} parent=0 // pred_region
    _
  $region25: #{rel_partial_decoder_layer.10} parent=0 // pred_fallthru
    _
  // Predicated region
  $region26: #{rel_partial_decoder_layer.10} parent=0 // pred_check
    _
  $region27: #{rel_partial_decoder_layer.10} parent=0 // pred_check_branch
    %134 = sbr.rel (0) target = $region29
  $region28: #{rel_partial_decoder_layer.10} parent=0 // pred_region
    _
  $region29: #{rel_partial_decoder_layer.10} parent=0 // pred_fallthru
    _

// kernel: rel_partial_decoder_layer.11
$region0: #{rel_partial_decoder_layer.11}
  #allocation0 [shape = 'u32[]', space=smem, size = 0x4, offset = 0x4, fixed_abs, tag = 'smem constant byte address 0x4 - core index']
  #allocation1 [shape = 'u32[144,128]{1,0:T(1,128)}', space=vmem, size = 0x12000, scoped, tag = 'internal scratch']
  %s0 = inlined_call_operand.vmem [shape: f32[16,32], index: 0, kind: input, shape index: {}]
  %s1 = inlined_call_operand.vmem [shape: bf16[32,64], index: 1, kind: input, shape index: {}]
  %s2 = inlined_call_operand.vmem [shape: f32[1,64], index: 2, kind: input, shape index: {}]
  %s3 = inlined_call_operand.vmem [shape: bf16[64,32], index: 3, kind: input, shape index: {}]
  %s4 = inlined_call_operand.vmem [shape: f32[1,32], index: 4, kind: input, shape index: {}]
  %s5 = inlined_call_operand.vmem [shape: f32[1,32], index: 5, kind: input, shape index: {}]
  %s6 = inlined_call_operand.vmem [shape: f32[1,32], index: 6, kind: input, shape index: {}]
  %s7 = inlined_call_operand.vmem [shape: f32[16,32], index: 7, kind: output, shape index: {}]
  %s8 = sld [smem:[#allocation0]]
  $region38: #{rel_partial_decoder_layer.11} parent=0
    _
  %s10 = ssub.s32 1, %s8
  %s11 = scalar_select 0, %s10, %s8
  // Predicated region
  $region2: #{rel_partial_decoder_layer.11} parent=0 // pred_check
    _
  $region3: #{rel_partial_decoder_layer.11} parent=0 // pred_check_branch
    %13 = sbr.rel (0) target = $region5
  $region4: #{rel_partial_decoder_layer.11} parent=0 // pred_region
    _
  $region5: #{rel_partial_decoder_layer.11} parent=0 // pred_fallthru
    _
  // Predicated region
  $region6: #{rel_partial_decoder_layer.11} parent=0 // pred_check
    _
  $region7: #{rel_partial_decoder_layer.11} parent=0 // pred_check_branch
    %15 = sbr.rel (0) target = $region9
  $region8: #{rel_partial_decoder_layer.11} parent=0 // pred_region
    _
  $region9: #{rel_partial_decoder_layer.11} parent=0 // pred_fallthru
    _
  // Predicated region
  $region10: #{rel_partial_decoder_layer.11} parent=0 // pred_check
    _
  $region11: #{rel_partial_decoder_layer.11} parent=0 // pred_check_branch
    %17 = sbr.rel (0) target = $region13
  $region12: #{rel_partial_decoder_layer.11} parent=0 // pred_region
    _
  $region13: #{rel_partial_decoder_layer.11} parent=0 // pred_fallthru
    _
  // Predicated region
  $region14: #{rel_partial_decoder_layer.11} parent=0 // pred_check
    _
  $region15: #{rel_partial_decoder_layer.11} parent=0 // pred_check_branch
    %19 = sbr.rel (0) target = $region17
  $region16: #{rel_partial_decoder_layer.11} parent=0 // pred_region
    _
  $region17: #{rel_partial_decoder_layer.11} parent=0 // pred_fallthru
    _
  // Predicated region
  $region18: #{rel_partial_decoder_layer.11} parent=0 // pred_check
    _
  $region19: #{rel_partial_decoder_layer.11} parent=0 // pred_check_branch
    %21 = sbr.rel (0) target = $region21
  $region20: #{rel_partial_decoder_layer.11} parent=0 // pred_region
    _
  $region21: #{rel_partial_decoder_layer.11} parent=0 // pred_fallthru
    _
  // Predicated region
  $region22: #{rel_partial_decoder_layer.11} parent=0 // pred_check
    _
  $region23: #{rel_partial_decoder_layer.11} parent=0 // pred_check_branch
    %23 = sbr.rel (0) target = $region25
  $region24: #{rel_partial_decoder_layer.11} parent=0 // pred_region
    _
  $region25: #{rel_partial_decoder_layer.11} parent=0 // pred_fallthru
    _
  // Predicated region
  $region26: #{rel_partial_decoder_layer.11} parent=0 // pred_check
    _
  $region27: #{rel_partial_decoder_layer.11} parent=0 // pred_check_branch
    %25 = sbr.rel (0) target = $region29
  $region28: #{rel_partial_decoder_layer.11} parent=0 // pred_region
    _
  $region29: #{rel_partial_decoder_layer.11} parent=0 // pred_fallthru
    _
  %v27 = vld [vmem:[%s0] sm:$0xff]
  %v28 = vld [vmem:[%s0 + $0x8] sm:$0xff]
  %v29 = vpack.c.bf16 %v28, %v27
  %v30 = vld [vmem:[%s1] sm:$0xf]
  %v31 = vld [vmem:[%s1 + $0x4] sm:$0xf]
  %v32 = vld [vmem:[%s1 + $0x8] sm:$0xf]
  %v33 = vld [vmem:[%s1 + $0xc] sm:$0xf]
  %v34 = vld [vmem:[%s2] sm:$0x1]
  %v36 = vlaneseq
  %v37 = vshrl.u32 %v36, 7
  %v38 = vsub.s32 0, %v37
  %v39 = vrot.slane %v34, %v38
  %v45 = vunpack.c.l.b16 %v30
  %v46 = vunpack.c.l.b16 %v31
  %v47 = vunpack.c.l.b16 %v32
  %v48 = vunpack.c.l.b16 %v33
  %v49 = vpack.c.b16 %v46, %v45
  %v50 = vpack.c.b16 %v48, %v47
  %vm53 = vcmask 261120
  %v55 = vsel %vm53, %v29, 0
  %57 = vmatprep.subr.bf16.mxu0 0
  %58 = vmatpush1.bf16.msra.mxu0 0
  %59 = vmatprep.subr.bf16.mxu0 0
  %60 = vmatpush1.bf16.msra.mxu0 0
  %61 = vmatprep.subr.bf16.mxu0 0
  %62 = vmatpush1.bf16.msra.mxu0 0
  %63 = vmatprep.subr.bf16.mxu0 0
  %64 = vmatpush1.bf16.msra.mxu0 0
  %65 = vmatprep.subr.bf16.mxu0 0
  %66 = vmatpush1.bf16.msra.mxu0 0
  %67 = vmatprep.subr.bf16.mxu0 0
  %68 = vmatpush1.bf16.msra.mxu0 0
  %69 = vmatprep.subr.bf16.mxu0 0
  %70 = vmatpush1.bf16.msra.mxu0 %v50
  %71 = vmatprep.subr.bf16.mxu0 0
  %72 = vmatpush1.bf16.msra.mxu0 %v49
  %73 = vmatprep.subr.bf16.mxu0 0
  %74 = vmatpush2.bf16.msra.mxu0 0
  %75 = vmatprep.subr.bf16.mxu0 0
  %76 = vmatpush2.bf16.msra.mxu0 0
  %77 = vmatprep.subr.bf16.mxu0 0
  %78 = vmatpush2.bf16.msra.mxu0 0
  %79 = vmatprep.subr.bf16.mxu0 0
  %80 = vmatpush2.bf16.msra.mxu0 0
  %81 = vmatprep.subr.bf16.mxu0 0
  %82 = vmatpush2.bf16.msra.mxu0 0
  %83 = vmatprep.subr.bf16.mxu0 0
  %84 = vmatpush2.bf16.msra.mxu0 0
  %85 = vmatprep.subr.bf16.mxu0 0
  %86 = vmatpush2.bf16.msra.mxu0 0
  %87 = vmatprep.subr.bf16.mxu0 0
  %88 = vmatpush2.bf16.msra.mxu0 0
  %89 = vmatprep.mubr.bf16.mxu0 0
  %90 = vmatmul.mubr.bf16.gmra.mxu0 %v55
  %v91 = vpop.f32.mrf.mxu0
  %v92 = vadd.f32 %v39, %v91
  %v93 = vpop.f32.mrf.mxu0
  %v94 = vpop.f32.mrf.mxu0
  %v95 = vadd.f32 %v39, %v94
  %v96 = vpop.f32.mrf.mxu0
  %97 = vdwg.mxu0
  %v98 = vmax.f32 %v92, 0.0
  %v99 = vmax.f32 %v95, 0.0
  %v100 = vpack.c.bf16 %v99, %v98
  %v101 = vld [vmem:[%s3] sm:$0xf]
  %v102 = vld [vmem:[%s3 + $0x4] sm:$0xf]
  %v103 = vld [vmem:[%s3 + $0x8] sm:$0xf]
  %v104 = vld [vmem:[%s3 + $0xc] sm:$0xf]
  %v105 = vld [vmem:[%s3 + $0x10] sm:$0xf]
  %v106 = vld [vmem:[%s3 + $0x14] sm:$0xf]
  %v107 = vld [vmem:[%s3 + $0x18] sm:$0xf]
  %v108 = vld [vmem:[%s3 + $0x1c] sm:$0xf]
  %v109 = vld [vmem:[%s4] sm:$0x1]
  %v111 = vlaneseq
  %v112 = vshrl.u32 %v111, 7
  %v113 = vsub.s32 0, %v112
  %v114 = vrot.slane %v109, %v113
  %v124 = vunpack.c.l.b16 %v101
  %v125 = vunpack.c.l.b16 %v102
  %v126 = vunpack.c.l.b16 %v103
  %v127 = vunpack.c.l.b16 %v104
  %v128 = vunpack.c.l.b16 %v105
  %v129 = vunpack.c.l.b16 %v106
  %v130 = vunpack.c.l.b16 %v107
  %v131 = vunpack.c.l.b16 %v108
  %v132 = vpack.c.b16 %v125, %v124
  %v133 = vpack.c.b16 %v127, %v126
  %v134 = vpack.c.b16 %v129, %v128
  %v135 = vpack.c.b16 %v131, %v130
  %vm140 = vcmask 523264
  %v142 = vsel %vm140, %v100, 0
  %144 = vmatprep.subr.bf16.mxu0 0
  %145 = vmatpush1.bf16.msra.mxu0 0
  %146 = vmatprep.subr.bf16.mxu0 0
  %147 = vmatpush1.bf16.msra.mxu0 0
  %148 = vmatprep.subr.bf16.mxu0 0
  %149 = vmatpush1.bf16.msra.mxu0 0
  %150 = vmatprep.subr.bf16.mxu0 0
  %151 = vmatpush1.bf16.msra.mxu0 0
  %152 = vmatprep.subr.bf16.mxu0 0
  %153 = vmatpush1.bf16.msra.mxu0 %v135
  %154 = vmatprep.subr.bf16.mxu0 0
  %155 = vmatpush1.bf16.msra.mxu0 %v134
  %156 = vmatprep.subr.bf16.mxu0 0
  %157 = vmatpush1.bf16.msra.mxu0 %v133
  %158 = vmatprep.subr.bf16.mxu0 0
  %159 = vmatpush1.bf16.msra.mxu0 %v132
  %160 = vmatprep.subr.bf16.mxu0 0
  %161 = vmatpush2.bf16.msra.mxu0 0
  %162 = vmatprep.subr.bf16.mxu0 0
  %163 = vmatpush2.bf16.msra.mxu0 0
  %164 = vmatprep.subr.bf16.mxu0 0
  %165 = vmatpush2.bf16.msra.mxu0 0
  %166 = vmatprep.subr.bf16.mxu0 0
  %167 = vmatpush2.bf16.msra.mxu0 0
  %168 = vmatprep.subr.bf16.mxu0 0
  %169 = vmatpush2.bf16.msra.mxu0 0
  %170 = vmatprep.subr.bf16.mxu0 0
  %171 = vmatpush2.bf16.msra.mxu0 0
  %172 = vmatprep.subr.bf16.mxu0 0
  %173 = vmatpush2.bf16.msra.mxu0 0
  %174 = vmatprep.subr.bf16.mxu0 0
  %175 = vmatpush2.bf16.msra.mxu0 0
  %176 = vmatprep.mubr.bf16.mxu0 0
  %177 = vmatmul.mubr.bf16.gmra.mxu0 %v142
  %v178 = vpop.f32.mrf.mxu0
  %v179 = vadd.f32 %v114, %v178
  %v180 = vpop.f32.mrf.mxu0
  %v181 = vpop.f32.mrf.mxu0
  %v182 = vadd.f32 %v114, %v181
  %v183 = vpop.f32.mrf.mxu0
  %184 = vdwg.mxu0
  %v185 = vadd.f32 %v179, %v27
  %v186 = vadd.f32 %v182, %v28
  %v187 = vsel %vm53, %v185, 0.0
  %188 = vadd.xlane.f32.xlu0 %v187
  %v189 = vpop.xlane.xlu0 %188
  %v190 = vsel %vm53, %v186, 0.0
  %191 = vadd.xlane.f32.xlu0 %v190
  %v192 = vpop.xlane.xlu0 %191
  %v193 = vrcp.pop 32.0
  %v194 = vmul.f32 %v189, %v193
  %v195 = vmul.f32 %v192, %v193
  %v196 = vsub.f32 %v185, %v194
  %v197 = vsub.f32 %v186, %v195
  %v198 = vmul.f32 %v196, %v196
  %v199 = vmul.f32 %v197, %v197
  %v200 = vsel %vm53, %v198, 0.0
  %201 = vadd.xlane.f32.xlu0 %v200
  %v202 = vpop.xlane.xlu0 %201
  %v203 = vsel %vm53, %v199, 0.0
  %204 = vadd.xlane.f32.xlu0 %v203
  %v205 = vpop.xlane.xlu0 %204
  %v206 = vmul.f32 %v202, %v193
  %v207 = vmul.f32 %v205, %v193
  %v208 = vadd.f32 %v206, 1e-05
  %v209 = vadd.f32 %v207, 1e-05
  %v210 = vrsqrt.pop %v208
  %v211 = vrsqrt.pop %v209
  %v212 = vmul.f32 %v196, %v210
  %v213 = vmul.f32 %v197, %v211
  %v214 = vld [vmem:[%s5] sm:$0x1]
  %v216 = vlaneseq
  %v217 = vshrl.u32 %v216, 7
  %v218 = vsub.s32 0, %v217
  %v219 = vrot.slane %v214, %v218
  %v221 = vmul.f32 %v212, %v219
  %v222 = vmul.f32 %v213, %v219
  %v223 = vld [vmem:[%s6] sm:$0x1]
  %v225 = vlaneseq
  %v226 = vshrl.u32 %v225, 7
  %v227 = vsub.s32 0, %v226
  %v228 = vrot.slane %v223, %v227
  %v230 = vadd.f32 %v221, %v228
  %v231 = vadd.f32 %v222, %v228
  %232 = vst.msk [vmem:[%s7] sm:$0xff] %vm53, %v230
  %233 = vst.msk [vmem:[%s7 + $0x8] sm:$0xff] %vm53, %v231
  // Predicated region
  $region30: #{rel_partial_decoder_layer.11} parent=0 // pred_check
    _
  $region31: #{rel_partial_decoder_layer.11} parent=0 // pred_check_branch
    %235 = sbr.rel (0) target = $region33
  $region32: #{rel_partial_decoder_layer.11} parent=0 // pred_region
    _
  $region33: #{rel_partial_decoder_layer.11} parent=0 // pred_fallthru
    _
  // Predicated region
  $region34: #{rel_partial_decoder_layer.11} parent=0 // pred_check
    _
  $region35: #{rel_partial_decoder_layer.11} parent=0 // pred_check_branch
    %237 = sbr.rel (0) target = $region37
  $region36: #{rel_partial_decoder_layer.11} parent=0 // pred_region
    _
  $region37: #{rel_partial_decoder_layer.11} parent=0 // pred_fallthru
    _

</llo_original>
